<compile_context>
chip_gen: v5e
topology: v5e:2x2
jax: 0.10.0
libtpu: 0.0.40
codegen_flags: <defaults>
</compile_context>

<pallas_src>
import functools

import jax
import jax.numpy as jnp
from jax.experimental import pallas as pl
from jax.experimental.pallas import tpu as pltpu


def _round_up(x, m):
    return (x + m - 1) // m * m


def _vicreg_kernel(z1_ref, z2_ref, out_ref,
                   cov1_acc, cov2_acc,
                   sum1_acc, sum2_acc, sq1_acc, sq2_acc,
                   sim_acc, t1_acc, t2_acc,
                   prev1, prev2,
                   *, n_real, d_real, tn, mask_rows, mxu_dtype,
                   sim_w, var_w, cov_w, temp_w):
    t = pl.program_id(0)
    nt = pl.num_programs(0)

    # ---- init accumulators on the first tile --------------------------------
    @pl.when(t == 0)
    def _init():
        cov1_acc[...] = jnp.zeros_like(cov1_acc)
        cov2_acc[...] = jnp.zeros_like(cov2_acc)
        sum1_acc[...] = jnp.zeros_like(sum1_acc)
        sum2_acc[...] = jnp.zeros_like(sum2_acc)
        sq1_acc[...] = jnp.zeros_like(sq1_acc)
        sq2_acc[...] = jnp.zeros_like(sq2_acc)
        sim_acc[...] = jnp.zeros_like(sim_acc)
        t1_acc[...] = jnp.zeros_like(t1_acc)
        t2_acc[...] = jnp.zeros_like(t2_acc)
        prev1[...] = jnp.zeros_like(prev1)
        prev2[...] = jnp.zeros_like(prev2)

    z1_n = z1_ref[...]                      # native dtype for the MXU
    z2_n = z2_ref[...]

    row = jax.lax.broadcasted_iota(jnp.int32, (tn, 1), 0)
    g = t * tn + row                        # global row index of each tile row

    if mask_rows:
        # Partial last block: rows >= n_real hold unspecified data.  Zero them
        # with a select (safe even if the garbage contains NaN/Inf); all sums,
        # Gram products and diffs then see exact zero padding.
        valid = g < n_real
        z1_n = jnp.where(valid, z1_n, jnp.zeros_like(z1_n))
        z2_n = jnp.where(valid, z2_n, jnp.zeros_like(z2_n))

    z1 = z1_n.astype(jnp.float32)           # f32 for elementwise stats
    z2 = z2_n.astype(jnp.float32)

    # ---- Gram accumulation on the MXU (contract the batch/row axis directly,
    #      no explicit transpose) ---------------------------------------------
    z1_m = z1_n if mxu_dtype is None else z1_n.astype(mxu_dtype)
    z2_m = z2_n if mxu_dtype is None else z2_n.astype(mxu_dtype)
    dn = (((0,), (0,)), ((), ()))
    cov1_acc[...] += jax.lax.dot_general(
        z1_m, z1_m, dn, preferred_element_type=jnp.float32)
    cov2_acc[...] += jax.lax.dot_general(
        z2_m, z2_m, dn, preferred_element_type=jnp.float32)

    # ---- fused single pass over the tile for all elementwise stats ----------
    sum1_acc[...] += jnp.sum(z1, axis=0, keepdims=True)
    sum2_acc[...] += jnp.sum(z2, axis=0, keepdims=True)
    sq1_acc[...] += jnp.sum(z1 * z1, axis=0, keepdims=True)
    sq2_acc[...] += jnp.sum(z2 * z2, axis=0, keepdims=True)

    d12 = z1 - z2
    sim_acc[...] += jnp.sum(d12 * d12, axis=0, keepdims=True)

    # ---- temporal consistency on raw z (mean-centering cancels in diffs) ----
    # Row i of the tile represents the diff z[g] - z[g-1] with g = t*tn + i;
    # valid diffs are 1 <= g <= n_real - 1.  One sublane roll per tensor (XLU)
    # replaces the four unaligned slices; the cross-tile predecessor row comes
    # from the (1, D) prev carry selected into row 0.
    tmask = jnp.logical_and(g >= 1, g < n_real).astype(jnp.float32)
    z1s = jnp.where(row == 0, prev1[...], pltpu.roll(z1, shift=1, axis=0))
    z2s = jnp.where(row == 0, prev2[...], pltpu.roll(z2, shift=1, axis=0))
    d1 = z1 - z1s
    d2 = z2 - z2s
    t1_acc[...] += jnp.sum((tmask * d1) * d1, axis=0, keepdims=True)
    t2_acc[...] += jnp.sum((tmask * d2) * d2, axis=0, keepdims=True)
    # carry this tile's last row for the next tile
    prev1[...] = z1[tn - 1:tn, :]
    prev2[...] = z2[tn - 1:tn, :]

    # ---- finalize once, on the last tile -------------------------------------
    @pl.when(t == nt - 1)
    def _finalize():
        n = jnp.float32(n_real)
        inv_nm1 = jnp.float32(1.0) / jnp.float32(n_real - 1)

        mean1 = sum1_acc[...] * (1.0 / n_real)
        mean2 = sum2_acc[...] * (1.0 / n_real)

        # unbiased per-feature variance (== diag of the covariance, single-pass
        # formula; cancellation caveat for data with mean >> std)
        var1 = (sq1_acc[...] - n * mean1 * mean1) * inv_nm1
        var2 = (sq2_acc[...] - n * mean2 * mean2) * inv_nm1

        d_pad = mean1.shape[1]
        col = jax.lax.broadcasted_iota(jnp.int32, (1, d_pad), 1)
        col_mask = col < d_real

        std1 = jnp.sqrt(var1 + 1e-4)
        std2 = jnp.sqrt(var2 + 1e-4)
        hinge = (jnp.where(col_mask, jnp.maximum(1.0 - std1, 0.0), 0.0)
                 + jnp.where(col_mask, jnp.maximum(1.0 - std2, 0.0), 0.0))
        var_loss = jnp.sum(hinge) / d_real

        # sum over all entries of cov^2 without materializing cov / outer:
        #   cov = (G - n m m^T) / (n - 1)
        #   sum((G - n m m^T)^2) = sum(G^2) - 2n (m^T G m) + n^2 (sum m^2)^2
        def cov_sq_sum(g_ref, mean):
            G = g_ref[...]
            gm = jax.lax.dot_general(mean, G, (((1,), (0,)), ((), ())),
                                     preferred_element_type=jnp.float32)
            m_g_m = jnp.sum(gm * mean)
            m_sq = jnp.sum(mean * mean)
            return (jnp.sum(G * G) - 2.0 * n * m_g_m
                    + n * n * m_sq * m_sq) * (inv_nm1 * inv_nm1)

        # off-diagonal sum of squares = total - diagonal (diag(cov) == var)
        n_off = d_real * d_real - d_real
        cov_loss = (cov_sq_sum(cov1_acc, mean1) - jnp.sum(var1 * var1)
                    + cov_sq_sum(cov2_acc, mean2) - jnp.sum(var2 * var2)) / n_off

        sim_loss = jnp.sum(sim_acc[...]) * (1.0 / (n_real * d_real))

        if n_real >= 2:
            temporal = temp_w * (jnp.sum(t1_acc[...]) + jnp.sum(t2_acc[...])) \
                / jnp.float32((n_real - 1) * d_real)
        else:
            temporal = jnp.float32(0.0)

        out_ref[0, 0] = (sim_w * sim_loss + var_w * var_loss
                         + cov_w * cov_loss + temporal)


def _detect_vmem_capacity_bytes():
    try:
        info = pltpu.get_tpu_info()
        cap = int(getattr(info, "vmem_capacity_bytes", 0))
        if cap > 0:
            return cap
    except Exception:
        pass
    return 64 << 20  # conservative fallback, valid on every generation (v7x = 64 MiB/TC)


def _is_v5e():
    try:
        kind = jax.devices()[0].device_kind.lower()
        return ("v5 lite" in kind) or ("v5e" in kind) or ("v5litepod" in kind)
    except Exception:
        return False


def vicreg_loss(z1, z2, sim_weight=25.0, var_weight=25.0, cov_weight=1.0,
                temp_weight=0.3, tile_n=None, mxu_dtype="auto"):
    """Pallas implementation of VICRegLoss.forward(z1, z2) -> scalar."""
    assert z1.shape == z2.shape and z1.ndim == 2
    N, D = z1.shape
    d_pad = _round_up(D, 128)
    itemsize = jnp.dtype(z1.dtype).itemsize

    # Lane padding only (feature dim).  The batch dim uses a partial last block
    # + in-kernel row mask, so N is never padded/rewritten through HBM.
    if d_pad != D:
        z1 = jnp.pad(z1, ((0, 0), (0, d_pad - D)))
        z2 = jnp.pad(z2, ((0, 0), (0, d_pad - D)))

    # v5e has no native f32 MXU path; cast f32 inputs to bf16 for the Gram
    # matmuls only (f32 accumulation everywhere else).
    if mxu_dtype == "auto":
        mxu = jnp.bfloat16 if (z1.dtype == jnp.float32 and _is_v5e()) else None
    else:
        mxu = mxu_dtype

    # Batch tile: large enough to amortize the per-step (D,D) accumulator
    # read-modify-write + grid overhead; multiple of the sublane packing;
    # never larger than the (aligned) batch.
    align = 16 if itemsize <= 2 else 8
    if tile_n is None:
        tile_n = 1024 if itemsize <= 2 else 512
        if d_pad <= 128:
            tile_n *= 2
    tn = max(align, _round_up(min(tile_n, _round_up(N, align)), align))

    vmem_cap = _detect_vmem_capacity_bytes() - (4 << 20)

    def est_vmem(t):
        return (2 * 2 * t * d_pad * itemsize     # z1, z2 double-buffered tiles
                + 2 * d_pad * d_pad * 4          # Gram accumulators
                + 11 * 8 * d_pad * 4             # (1, d_pad) stats (padded to 8 rows)
                + 10 * t * d_pad * 4             # in-kernel f32 temporaries (upcasts/rolls/diffs)
                + d_pad * d_pad * 4              # epilogue square-reduce temporary
                + (8 << 20))                     # headroom

    while tn > align and est_vmem(tn) > vmem_cap:
        tn = max(align, _round_up(tn // 2, align))

    vmem_bytes = int(min(max(est_vmem(tn), 32 << 20), vmem_cap))

    grid = (pl.cdiv(N, tn),)
    mask_rows = (N % tn) != 0

    kernel = functools.partial(
        _vicreg_kernel, n_real=N, d_real=D, tn=tn, mask_rows=mask_rows,
        mxu_dtype=mxu, sim_w=float(sim_weight), var_w=float(var_weight),
        cov_w=float(cov_weight), temp_w=float(temp_weight))

    stat = lambda: pltpu.VMEM((1, d_pad), jnp.float32)

    out = pl.pallas_call(
        kernel,
        out_shape=jax.ShapeDtypeStruct((1, 1), jnp.float32),
        grid_spec=pltpu.PrefetchScalarGridSpec(
            num_scalar_prefetch=0,
            grid=grid,
            in_specs=[
                pl.BlockSpec((tn, d_pad), lambda i: (i, 0)),   # z1 tile
                pl.BlockSpec((tn, d_pad), lambda i: (i, 0)),   # z2 tile
            ],
            out_specs=pl.BlockSpec((1, 1), lambda i: (0, 0),
                                   memory_space=pltpu.MemorySpace.SMEM),
            scratch_shapes=[
                pltpu.VMEM((d_pad, d_pad), jnp.float32),   # Gram z1
                pltpu.VMEM((d_pad, d_pad), jnp.float32),   # Gram z2
                stat(), stat(),                            # sum1, sum2
                stat(), stat(),                            # sq1, sq2
                stat(),                                    # sim partial
                stat(), stat(),                            # temporal partials
                stat(), stat(),                            # prev rows z1, z2
            ],
        ),
        compiler_params=pltpu.CompilerParams(
            dimension_semantics=("arbitrary",),
            vmem_limit_bytes=vmem_bytes,
        ),
    )(z1, z2)
    return out[0, 0]


def _reference_loss(z1, z2, sim_w=25.0, var_w=25.0, cov_w=1.0, temp_w=0.3):
    # pure-JAX reference mirroring the PyTorch code exactly
    N, D = z1.shape
    sim_loss = jnp.mean((z1 - z2) ** 2)
    std1 = jnp.sqrt(jnp.var(z1, axis=0, ddof=1) + 1e-4)
    std2 = jnp.sqrt(jnp.var(z2, axis=0, ddof=1) + 1e-4)
    var_loss = jnp.mean(jnp.maximum(1 - std1, 0)) + jnp.mean(jnp.maximum(1 - std2, 0))
    z1c = z1 - z1.mean(axis=0)
    z2c = z2 - z2.mean(axis=0)
    cov1 = z1c.T @ z1c / (N - 1)
    cov2 = z2c.T @ z2c / (N - 1)
    off = ~jnp.eye(D, dtype=bool)
    n_off = D * D - D
    cov_loss = ((jnp.where(off, cov1, 0.0) ** 2).sum()
                + (jnp.where(off, cov2, 0.0) ** 2).sum()) / n_off

    def tloss(z):
        return temp_w * jnp.mean((z[1:] - z[:-1]) ** 2) if z.shape[0] >= 2 else 0.0

    temporal = tloss(z1c) + tloss(z2c)
    return sim_w * sim_loss + var_w * var_loss + cov_w * cov_loss + temporal


if __name__ == "__main__":
    key = jax.random.PRNGKey(0)
    k1, k2, k3, k4, k5, k6 = jax.random.split(key, 6)

    # Primary small test (module convention: (batch, embed_dim)).
    N, D = 8, 32
    z1 = jax.random.normal(k1, (N, D), dtype=jnp.float32)
    z2 = z1 + 0.1 * jax.random.normal(k2, (N, D), dtype=jnp.float32)
    loss = vicreg_loss(z1, z2)
    jax.block_until_ready(loss)
    ref = _reference_loss(z1, z2)
    assert jnp.allclose(loss, ref, rtol=1e-3, atol=1e-3), (loss, ref)

    # Multi-tile streaming, partial last tile (in-kernel row mask), feature
    # padding and the cross-tile temporal-boundary carry.
    N2, D2 = 20, 40
    a1 = jax.random.normal(k3, (N2, D2), dtype=jnp.float32)
    a2 = a1 + 0.1 * jax.random.normal(k4, (N2, D2), dtype=jnp.float32)
    loss2 = vicreg_loss(a1, a2, tile_n=8)
    jax.block_until_ready(loss2)
    ref2 = _reference_loss(a1, a2)
    assert jnp.allclose(loss2, ref2, rtol=1e-3, atol=1e-3), (loss2, ref2)

    # Medium test exercising the larger default batch tile + a partial tile.
    N3, D3 = 600, 256
    b1 = jax.random.normal(k5, (N3, D3), dtype=jnp.float32)
    b2 = b1 + 0.1 * jax.random.normal(k6, (N3, D3), dtype=jnp.float32)
    loss3 = vicreg_loss(b1, b2)
    jax.block_until_ready(loss3)
    ref3 = _reference_loss(b1, b2)
    assert jnp.allclose(loss3, ref3, rtol=2e-3, atol=2e-3), (loss3, ref3)

    print("KERNEL_OK")
</pallas_src>

<mosaic_0001>
module attributes {stable_mosaic.version = 11 : i64} {
  func.func @_vicreg_kernel(%arg0: i32, %arg1: memref<8x128xf32, #tpu.memory_space<vmem>>, %arg2: memref<8x128xf32, #tpu.memory_space<vmem>>, %arg3: memref<1x1xf32, #tpu.memory_space<smem>>, %arg4: memref<128x128xf32, #tpu.memory_space<vmem>>, %arg5: memref<128x128xf32, #tpu.memory_space<vmem>>, %arg6: memref<1x128xf32, #tpu.memory_space<vmem>>, %arg7: memref<1x128xf32, #tpu.memory_space<vmem>>, %arg8: memref<1x128xf32, #tpu.memory_space<vmem>>, %arg9: memref<1x128xf32, #tpu.memory_space<vmem>>, %arg10: memref<1x128xf32, #tpu.memory_space<vmem>>, %arg11: memref<1x128xf32, #tpu.memory_space<vmem>>, %arg12: memref<1x128xf32, #tpu.memory_space<vmem>>, %arg13: memref<1x128xf32, #tpu.memory_space<vmem>>, %arg14: memref<1x128xf32, #tpu.memory_space<vmem>>) attributes {dimension_semantics = [#tpu.dimension_semantics<arbitrary>], iteration_bounds = array<i64: 1>, scalar_prefetch = 0 : i64, scratch_operands = 11 : i64, tpu.core_type = #tpu.core_type<tc>, window_params = [{transform_indices = @transform_0, window_bounds = array<i64: 8, 128>}, {transform_indices = @transform_1, window_bounds = array<i64: 8, 128>}, {transform_indices = @transform_2, window_bounds = array<i64: 1, 1>}]} {
    %c0_i32 = arith.constant 0 : i32
    %0 = arith.cmpi eq, %arg0, %c0_i32 : i32
    %1 = arith.extui %0 : i1 to i32
    %c0_i32_0 = arith.constant 0 : i32
    %2 = arith.cmpi ne, %1, %c0_i32_0 : i32
    scf.if %2 {
      %cst_63 = arith.constant 0.000000e+00 : f32
      %96 = vector.broadcast %cst_63 : f32 to vector<128x128xf32>
      %c0_64 = arith.constant 0 : index
      %c0_65 = arith.constant 0 : index
      %97 = vector.load %arg4[%c0_64, %c0_65] : memref<128x128xf32, #tpu.memory_space<vmem>>, vector<128x128xf32>
      tpu.vector_store %arg4[%c0_64, %c0_65], %96 {strides = array<i32>} : memref<128x128xf32, #tpu.memory_space<vmem>>, vector<128x128xf32>,
      %cst_66 = arith.constant 0.000000e+00 : f32
      %98 = vector.broadcast %cst_66 : f32 to vector<128x128xf32>
      %c0_67 = arith.constant 0 : index
      %c0_68 = arith.constant 0 : index
      %99 = vector.load %arg5[%c0_67, %c0_68] : memref<128x128xf32, #tpu.memory_space<vmem>>, vector<128x128xf32>
      tpu.vector_store %arg5[%c0_67, %c0_68], %98 {strides = array<i32>} : memref<128x128xf32, #tpu.memory_space<vmem>>, vector<128x128xf32>,
      %cst_69 = arith.constant 0.000000e+00 : f32
      %100 = vector.broadcast %cst_69 : f32 to vector<1x128xf32>
      %c0_70 = arith.constant 0 : index
      %c0_71 = arith.constant 0 : index
      %101 = vector.load %arg6[%c0_70, %c0_71] : memref<1x128xf32, #tpu.memory_space<vmem>>, vector<1x128xf32>
      tpu.vector_store %arg6[%c0_70, %c0_71], %100 {strides = array<i32>} : memref<1x128xf32, #tpu.memory_space<vmem>>, vector<1x128xf32>,
      %cst_72 = arith.constant 0.000000e+00 : f32
      %102 = vector.broadcast %cst_72 : f32 to vector<1x128xf32>
      %c0_73 = arith.constant 0 : index
      %c0_74 = arith.constant 0 : index
      %103 = vector.load %arg7[%c0_73, %c0_74] : memref<1x128xf32, #tpu.memory_space<vmem>>, vector<1x128xf32>
      tpu.vector_store %arg7[%c0_73, %c0_74], %102 {strides = array<i32>} : memref<1x128xf32, #tpu.memory_space<vmem>>, vector<1x128xf32>,
      %cst_75 = arith.constant 0.000000e+00 : f32
      %104 = vector.broadcast %cst_75 : f32 to vector<1x128xf32>
      %c0_76 = arith.constant 0 : index
      %c0_77 = arith.constant 0 : index
      %105 = vector.load %arg8[%c0_76, %c0_77] : memref<1x128xf32, #tpu.memory_space<vmem>>, vector<1x128xf32>
      tpu.vector_store %arg8[%c0_76, %c0_77], %104 {strides = array<i32>} : memref<1x128xf32, #tpu.memory_space<vmem>>, vector<1x128xf32>,
      %cst_78 = arith.constant 0.000000e+00 : f32
      %106 = vector.broadcast %cst_78 : f32 to vector<1x128xf32>
      %c0_79 = arith.constant 0 : index
      %c0_80 = arith.constant 0 : index
      %107 = vector.load %arg9[%c0_79, %c0_80] : memref<1x128xf32, #tpu.memory_space<vmem>>, vector<1x128xf32>
      tpu.vector_store %arg9[%c0_79, %c0_80], %106 {strides = array<i32>} : memref<1x128xf32, #tpu.memory_space<vmem>>, vector<1x128xf32>,
      %cst_81 = arith.constant 0.000000e+00 : f32
      %108 = vector.broadcast %cst_81 : f32 to vector<1x128xf32>
      %c0_82 = arith.constant 0 : index
      %c0_83 = arith.constant 0 : index
      %109 = vector.load %arg10[%c0_82, %c0_83] : memref<1x128xf32, #tpu.memory_space<vmem>>, vector<1x128xf32>
      tpu.vector_store %arg10[%c0_82, %c0_83], %108 {strides = array<i32>} : memref<1x128xf32, #tpu.memory_space<vmem>>, vector<1x128xf32>,
      %cst_84 = arith.constant 0.000000e+00 : f32
      %110 = vector.broadcast %cst_84 : f32 to vector<1x128xf32>
      %c0_85 = arith.constant 0 : index
      %c0_86 = arith.constant 0 : index
      %111 = vector.load %arg11[%c0_85, %c0_86] : memref<1x128xf32, #tpu.memory_space<vmem>>, vector<1x128xf32>
      tpu.vector_store %arg11[%c0_85, %c0_86], %110 {strides = array<i32>} : memref<1x128xf32, #tpu.memory_space<vmem>>, vector<1x128xf32>,
      %cst_87 = arith.constant 0.000000e+00 : f32
      %112 = vector.broadcast %cst_87 : f32 to vector<1x128xf32>
      %c0_88 = arith.constant 0 : index
      %c0_89 = arith.constant 0 : index
      %113 = vector.load %arg12[%c0_88, %c0_89] : memref<1x128xf32, #tpu.memory_space<vmem>>, vector<1x128xf32>
      tpu.vector_store %arg12[%c0_88, %c0_89], %112 {strides = array<i32>} : memref<1x128xf32, #tpu.memory_space<vmem>>, vector<1x128xf32>,
      %cst_90 = arith.constant 0.000000e+00 : f32
      %114 = vector.broadcast %cst_90 : f32 to vector<1x128xf32>
      %c0_91 = arith.constant 0 : index
      %c0_92 = arith.constant 0 : index
      %115 = vector.load %arg13[%c0_91, %c0_92] : memref<1x128xf32, #tpu.memory_space<vmem>>, vector<1x128xf32>
      tpu.vector_store %arg13[%c0_91, %c0_92], %114 {strides = array<i32>} : memref<1x128xf32, #tpu.memory_space<vmem>>, vector<1x128xf32>,
      %cst_93 = arith.constant 0.000000e+00 : f32
      %116 = vector.broadcast %cst_93 : f32 to vector<1x128xf32>
      %c0_94 = arith.constant 0 : index
      %c0_95 = arith.constant 0 : index
      %117 = vector.load %arg14[%c0_94, %c0_95] : memref<1x128xf32, #tpu.memory_space<vmem>>, vector<1x128xf32>
      tpu.vector_store %arg14[%c0_94, %c0_95], %116 {strides = array<i32>} : memref<1x128xf32, #tpu.memory_space<vmem>>, vector<1x128xf32>,
    } else {
    }
    %c0 = arith.constant 0 : index
    %c0_1 = arith.constant 0 : index
    %3 = vector.load %arg1[%c0, %c0_1] : memref<8x128xf32, #tpu.memory_space<vmem>>, vector<8x128xf32>
    %c0_2 = arith.constant 0 : index
    %c0_3 = arith.constant 0 : index
    %4 = vector.load %arg2[%c0_2, %c0_3] : memref<8x128xf32, #tpu.memory_space<vmem>>, vector<8x128xf32>
    %5 = tpu.iota {dimensions = array<i32: 0>} : vector<8x1xi32>
    %c8_i32 = arith.constant 8 : i32
    %6 = arith.muli %arg0, %c8_i32 : i32
    %7 = vector.broadcast %6 : i32 to vector<8x1xi32>
    %8 = arith.addi %7, %5 : vector<8x1xi32>
    %c0_4 = arith.constant 0 : index
    %c0_5 = arith.constant 0 : index
    %9 = vector.load %arg4[%c0_4, %c0_5] : memref<128x128xf32, #tpu.memory_space<vmem>>, vector<128x128xf32>
    %cst = arith.constant dense<0.000000e+00> : vector<128x128xf32>
    %10 = tpu.matmul %3, %3, %cst {dimension_numbers = #tpu.dot_dimension_numbers<[0], [0], [1], [1], [0, 1, 1, 1], [], []>} : vector<8x128xf32>, vector<8x128xf32>, vector<128x128xf32> -> vector<128x128xf32>
    %11 = arith.addf %9, %10 : vector<128x128xf32>
    %c0_6 = arith.constant 0 : index
    %c0_7 = arith.constant 0 : index
    %12 = vector.load %arg4[%c0_6, %c0_7] : memref<128x128xf32, #tpu.memory_space<vmem>>, vector<128x128xf32>
    tpu.vector_store %arg4[%c0_6, %c0_7], %11 {strides = array<i32>} : memref<128x128xf32, #tpu.memory_space<vmem>>, vector<128x128xf32>,
    %c0_8 = arith.constant 0 : index
    %c0_9 = arith.constant 0 : index
    %13 = vector.load %arg5[%c0_8, %c0_9] : memref<128x128xf32, #tpu.memory_space<vmem>>, vector<128x128xf32>
    %cst_10 = arith.constant dense<0.000000e+00> : vector<128x128xf32>
    %14 = tpu.matmul %4, %4, %cst_10 {dimension_numbers = #tpu.dot_dimension_numbers<[0], [0], [1], [1], [0, 1, 1, 1], [], []>} : vector<8x128xf32>, vector<8x128xf32>, vector<128x128xf32> -> vector<128x128xf32>
    %15 = arith.addf %13, %14 : vector<128x128xf32>
    %c0_11 = arith.constant 0 : index
    %c0_12 = arith.constant 0 : index
    %16 = vector.load %arg5[%c0_11, %c0_12] : memref<128x128xf32, #tpu.memory_space<vmem>>, vector<128x128xf32>
    tpu.vector_store %arg5[%c0_11, %c0_12], %15 {strides = array<i32>} : memref<128x128xf32, #tpu.memory_space<vmem>>, vector<128x128xf32>,
    %c0_13 = arith.constant 0 : index
    %c0_14 = arith.constant 0 : index
    %17 = vector.load %arg6[%c0_13, %c0_14] : memref<1x128xf32, #tpu.memory_space<vmem>>, vector<1x128xf32>
    %cst_15 = arith.constant dense<0.000000e+00> : vector<128xf32>
    %18 = vector.multi_reduction <add>, %3, %cst_15 [0] : vector<8x128xf32> to vector<128xf32>
    %19 = vector.shape_cast %18 : vector<128xf32> to vector<1x128xf32>
    %20 = arith.addf %17, %19 : vector<1x128xf32>
    %c0_16 = arith.constant 0 : index
    %c0_17 = arith.constant 0 : index
    %21 = vector.load %arg6[%c0_16, %c0_17] : memref<1x128xf32, #tpu.memory_space<vmem>>, vector<1x128xf32>
    tpu.vector_store %arg6[%c0_16, %c0_17], %20 {strides = array<i32>} : memref<1x128xf32, #tpu.memory_space<vmem>>, vector<1x128xf32>,
    %c0_18 = arith.constant 0 : index
    %c0_19 = arith.constant 0 : index
    %22 = vector.load %arg7[%c0_18, %c0_19] : memref<1x128xf32, #tpu.memory_space<vmem>>, vector<1x128xf32>
    %cst_20 = arith.constant dense<0.000000e+00> : vector<128xf32>
    %23 = vector.multi_reduction <add>, %4, %cst_20 [0] : vector<8x128xf32> to vector<128xf32>
    %24 = vector.shape_cast %23 : vector<128xf32> to vector<1x128xf32>
    %25 = arith.addf %22, %24 : vector<1x128xf32>
    %c0_21 = arith.constant 0 : index
    %c0_22 = arith.constant 0 : index
    %26 = vector.load %arg7[%c0_21, %c0_22] : memref<1x128xf32, #tpu.memory_space<vmem>>, vector<1x128xf32>
    tpu.vector_store %arg7[%c0_21, %c0_22], %25 {strides = array<i32>} : memref<1x128xf32, #tpu.memory_space<vmem>>, vector<1x128xf32>,
    %c0_23 = arith.constant 0 : index
    %c0_24 = arith.constant 0 : index
    %27 = vector.load %arg8[%c0_23, %c0_24] : memref<1x128xf32, #tpu.memory_space<vmem>>, vector<1x128xf32>
    %28 = arith.mulf %3, %3 : vector<8x128xf32>
    %cst_25 = arith.constant dense<0.000000e+00> : vector<128xf32>
    %29 = vector.multi_reduction <add>, %28, %cst_25 [0] : vector<8x128xf32> to vector<128xf32>
    %30 = vector.shape_cast %29 : vector<128xf32> to vector<1x128xf32>
    %31 = arith.addf %27, %30 : vector<1x128xf32>
    %c0_26 = arith.constant 0 : index
    %c0_27 = arith.constant 0 : index
    %32 = vector.load %arg8[%c0_26, %c0_27] : memref<1x128xf32, #tpu.memory_space<vmem>>, vector<1x128xf32>
    tpu.vector_store %arg8[%c0_26, %c0_27], %31 {strides = array<i32>} : memref<1x128xf32, #tpu.memory_space<vmem>>, vector<1x128xf32>,
    %c0_28 = arith.constant 0 : index
    %c0_29 = arith.constant 0 : index
    %33 = vector.load %arg9[%c0_28, %c0_29] : memref<1x128xf32, #tpu.memory_space<vmem>>, vector<1x128xf32>
    %34 = arith.mulf %4, %4 : vector<8x128xf32>
    %cst_30 = arith.constant dense<0.000000e+00> : vector<128xf32>
    %35 = vector.multi_reduction <add>, %34, %cst_30 [0] : vector<8x128xf32> to vector<128xf32>
    %36 = vector.shape_cast %35 : vector<128xf32> to vector<1x128xf32>
    %37 = arith.addf %33, %36 : vector<1x128xf32>
    %c0_31 = arith.constant 0 : index
    %c0_32 = arith.constant 0 : index
    %38 = vector.load %arg9[%c0_31, %c0_32] : memref<1x128xf32, #tpu.memory_space<vmem>>, vector<1x128xf32>
    tpu.vector_store %arg9[%c0_31, %c0_32], %37 {strides = array<i32>} : memref<1x128xf32, #tpu.memory_space<vmem>>, vector<1x128xf32>,
    %39 = arith.subf %3, %4 : vector<8x128xf32>
    %c0_33 = arith.constant 0 : index
    %c0_34 = arith.constant 0 : index
    %40 = vector.load %arg10[%c0_33, %c0_34] : memref<1x128xf32, #tpu.memory_space<vmem>>, vector<1x128xf32>
    %41 = arith.mulf %39, %39 : vector<8x128xf32>
    %cst_35 = arith.constant dense<0.000000e+00> : vector<128xf32>
    %42 = vector.multi_reduction <add>, %41, %cst_35 [0] : vector<8x128xf32> to vector<128xf32>
    %43 = vector.shape_cast %42 : vector<128xf32> to vector<1x128xf32>
    %44 = arith.addf %40, %43 : vector<1x128xf32>
    %c0_36 = arith.constant 0 : index
    %c0_37 = arith.constant 0 : index
    %45 = vector.load %arg10[%c0_36, %c0_37] : memref<1x128xf32, #tpu.memory_space<vmem>>, vector<1x128xf32>
    tpu.vector_store %arg10[%c0_36, %c0_37], %44 {strides = array<i32>} : memref<1x128xf32, #tpu.memory_space<vmem>>, vector<1x128xf32>,
    %c1_i32 = arith.constant 1 : i32
    %46 = vector.broadcast %c1_i32 : i32 to vector<8x1xi32>
    %47 = arith.cmpi sge, %8, %46 : vector<8x1xi32>
    %c8_i32_38 = arith.constant 8 : i32
    %48 = vector.broadcast %c8_i32_38 : i32 to vector<8x1xi32>
    %49 = arith.cmpi slt, %8, %48 : vector<8x1xi32>
    %50 = arith.andi %47, %49 : vector<8x1xi1>
    %51 = arith.extui %50 : vector<8x1xi1> to vector<8x1xi32>
    %52 = arith.sitofp %51 : vector<8x1xi32> to vector<8x1xf32>
    %c0_i32_39 = arith.constant 0 : i32
    %53 = vector.broadcast %c0_i32_39 : i32 to vector<8x1xi32>
    %54 = arith.cmpi eq, %5, %53 : vector<8x1xi32>
    %c0_40 = arith.constant 0 : index
    %c0_41 = arith.constant 0 : index
    %55 = vector.load %arg13[%c0_40, %c0_41] : memref<1x128xf32, #tpu.memory_space<vmem>>, vector<1x128xf32>
    %c1_i32_42 = arith.constant 1 : i32
    %56 = tpu.dynamic_rotate %3 by %c1_i32_42 dim 0 : vector<8x128xf32>, i32 -> vector<8x128xf32>
    %57 = vector.shape_cast %54 : vector<8x1xi1> to vector<8x1xi1>
    %58 = vector.broadcast %57 : vector<8x1xi1> to vector<8x128xi1>
    %59 = vector.shape_cast %55 : vector<1x128xf32> to vector<1x128xf32>
    %60 = vector.broadcast %59 : vector<1x128xf32> to vector<8x128xf32>
    %61 = arith.select %58, %60, %56 : vector<8x128xi1>, vector<8x128xf32>
    %c0_i32_43 = arith.constant 0 : i32
    %62 = vector.broadcast %c0_i32_43 : i32 to vector<8x1xi32>
    %63 = arith.cmpi eq, %5, %62 : vector<8x1xi32>
    %c0_44 = arith.constant 0 : index
    %c0_45 = arith.constant 0 : index
    %64 = vector.load %arg14[%c0_44, %c0_45] : memref<1x128xf32, #tpu.memory_space<vmem>>, vector<1x128xf32>
    %c1_i32_46 = arith.constant 1 : i32
    %65 = tpu.dynamic_rotate %4 by %c1_i32_46 dim 0 : vector<8x128xf32>, i32 -> vector<8x128xf32>
    %66 = vector.shape_cast %63 : vector<8x1xi1> to vector<8x1xi1>
    %67 = vector.broadcast %66 : vector<8x1xi1> to vector<8x128xi1>
    %68 = vector.shape_cast %64 : vector<1x128xf32> to vector<1x128xf32>
    %69 = vector.broadcast %68 : vector<1x128xf32> to vector<8x128xf32>
    %70 = arith.select %67, %69, %65 : vector<8x128xi1>, vector<8x128xf32>
    %71 = arith.subf %3, %61 : vector<8x128xf32>
    %72 = arith.subf %4, %70 : vector<8x128xf32>
    %c0_47 = arith.constant 0 : index
    %c0_48 = arith.constant 0 : index
    %73 = vector.load %arg11[%c0_47, %c0_48] : memref<1x128xf32, #tpu.memory_space<vmem>>, vector<1x128xf32>
    %74 = vector.broadcast %52 : vector<8x1xf32> to vector<8x128xf32>
    %75 = arith.mulf %74, %71 : vector<8x128xf32>
    %76 = arith.mulf %75, %71 : vector<8x128xf32>
    %cst_49 = arith.constant dense<0.000000e+00> : vector<128xf32>
    %77 = vector.multi_reduction <add>, %76, %cst_49 [0] : vector<8x128xf32> to vector<128xf32>
    %78 = vector.shape_cast %77 : vector<128xf32> to vector<1x128xf32>
    %79 = arith.addf %73, %78 : vector<1x128xf32>
    %c0_50 = arith.constant 0 : index
    %c0_51 = arith.constant 0 : index
    %80 = vector.load %arg11[%c0_50, %c0_51] : memref<1x128xf32, #tpu.memory_space<vmem>>, vector<1x128xf32>
    tpu.vector_store %arg11[%c0_50, %c0_51], %79 {strides = array<i32>} : memref<1x128xf32, #tpu.memory_space<vmem>>, vector<1x128xf32>,
    %c0_52 = arith.constant 0 : index
    %c0_53 = arith.constant 0 : index
    %81 = vector.load %arg12[%c0_52, %c0_53] : memref<1x128xf32, #tpu.memory_space<vmem>>, vector<1x128xf32>
    %82 = vector.broadcast %52 : vector<8x1xf32> to vector<8x128xf32>
    %83 = arith.mulf %82, %72 : vector<8x128xf32>
    %84 = arith.mulf %83, %72 : vector<8x128xf32>
    %cst_54 = arith.constant dense<0.000000e+00> : vector<128xf32>
    %85 = vector.multi_reduction <add>, %84, %cst_54 [0] : vector<8x128xf32> to vector<128xf32>
    %86 = vector.shape_cast %85 : vector<128xf32> to vector<1x128xf32>
    %87 = arith.addf %81, %86 : vector<1x128xf32>
    %c0_55 = arith.constant 0 : index
    %c0_56 = arith.constant 0 : index
    %88 = vector.load %arg12[%c0_55, %c0_56] : memref<1x128xf32, #tpu.memory_space<vmem>>, vector<1x128xf32>
    tpu.vector_store %arg12[%c0_55, %c0_56], %87 {strides = array<i32>} : memref<1x128xf32, #tpu.memory_space<vmem>>, vector<1x128xf32>,
    %89 = vector.extract_strided_slice %3 {offsets = [7, 0], sizes = [1, 128], strides = [1, 1]} : vector<8x128xf32> to vector<1x128xf32>
    %c0_57 = arith.constant 0 : index
    %c0_58 = arith.constant 0 : index
    %90 = vector.load %arg13[%c0_57, %c0_58] : memref<1x128xf32, #tpu.memory_space<vmem>>, vector<1x128xf32>
    tpu.vector_store %arg13[%c0_57, %c0_58], %89 {strides = array<i32>} : memref<1x128xf32, #tpu.memory_space<vmem>>, vector<1x128xf32>,
    %91 = vector.extract_strided_slice %4 {offsets = [7, 0], sizes = [1, 128], strides = [1, 1]} : vector<8x128xf32> to vector<1x128xf32>
    %c0_59 = arith.constant 0 : index
    %c0_60 = arith.constant 0 : index
    %92 = vector.load %arg14[%c0_59, %c0_60] : memref<1x128xf32, #tpu.memory_space<vmem>>, vector<1x128xf32>
    tpu.vector_store %arg14[%c0_59, %c0_60], %91 {strides = array<i32>} : memref<1x128xf32, #tpu.memory_space<vmem>>, vector<1x128xf32>,
    %c0_i32_61 = arith.constant 0 : i32
    %93 = arith.cmpi eq, %arg0, %c0_i32_61 : i32
    %94 = arith.extui %93 : i1 to i32
    %c0_i32_62 = arith.constant 0 : i32
    %95 = arith.cmpi ne, %94, %c0_i32_62 : i32
    scf.if %95 {
      %cst_63 = arith.constant 1.000000e+00 : f32
      %cst_64 = arith.constant 7.000000e+00 : f32
      %96 = arith.divf %cst_63, %cst_64 : f32
      %c0_65 = arith.constant 0 : index
      %c0_66 = arith.constant 0 : index
      %97 = vector.load %arg6[%c0_65, %c0_66] : memref<1x128xf32, #tpu.memory_space<vmem>>, vector<1x128xf32>
      %cst_67 = arith.constant 1.250000e-01 : f32
      %98 = vector.broadcast %cst_67 : f32 to vector<1x128xf32>
      %99 = arith.mulf %97, %98 : vector<1x128xf32>
      %c0_68 = arith.constant 0 : index
      %c0_69 = arith.constant 0 : index
      %100 = vector.load %arg7[%c0_68, %c0_69] : memref<1x128xf32, #tpu.memory_space<vmem>>, vector<1x128xf32>
      %cst_70 = arith.constant 1.250000e-01 : f32
      %101 = vector.broadcast %cst_70 : f32 to vector<1x128xf32>
      %102 = arith.mulf %100, %101 : vector<1x128xf32>
      %c0_71 = arith.constant 0 : index
      %c0_72 = arith.constant 0 : index
      %103 = vector.load %arg8[%c0_71, %c0_72] : memref<1x128xf32, #tpu.memory_space<vmem>>, vector<1x128xf32>
      %cst_73 = arith.constant 8.000000e+00 : f32
      %104 = vector.broadcast %cst_73 : f32 to vector<1x128xf32>
      %105 = arith.mulf %104, %99 : vector<1x128xf32>
      %106 = arith.mulf %105, %99 : vector<1x128xf32>
      %107 = arith.subf %103, %106 : vector<1x128xf32>
      %108 = vector.broadcast %96 : f32 to vector<1x128xf32>
      %109 = arith.mulf %107, %108 : vector<1x128xf32>
      %c0_74 = arith.constant 0 : index
      %c0_75 = arith.constant 0 : index
      %110 = vector.load %arg9[%c0_74, %c0_75] : memref<1x128xf32, #tpu.memory_space<vmem>>, vector<1x128xf32>
      %cst_76 = arith.constant 8.000000e+00 : f32
      %111 = vector.broadcast %cst_76 : f32 to vector<1x128xf32>
      %112 = arith.mulf %111, %102 : vector<1x128xf32>
      %113 = arith.mulf %112, %102 : vector<1x128xf32>
      %114 = arith.subf %110, %113 : vector<1x128xf32>
      %115 = vector.broadcast %96 : f32 to vector<1x128xf32>
      %116 = arith.mulf %114, %115 : vector<1x128xf32>
      %117 = tpu.iota {dimensions = array<i32: 1>} : vector<1x128xi32>
      %c32_i32 = arith.constant 32 : i32
      %118 = vector.broadcast %c32_i32 : i32 to vector<1x128xi32>
      %119 = arith.cmpi slt, %117, %118 : vector<1x128xi32>
      %cst_77 = arith.constant 9.99999974E-5 : f32
      %120 = vector.broadcast %cst_77 : f32 to vector<1x128xf32>
      %121 = arith.addf %109, %120 : vector<1x128xf32>
      %122 = math.sqrt %121 : vector<1x128xf32>
      %cst_78 = arith.constant 9.99999974E-5 : f32
      %123 = vector.broadcast %cst_78 : f32 to vector<1x128xf32>
      %124 = arith.addf %116, %123 : vector<1x128xf32>
      %125 = math.sqrt %124 : vector<1x128xf32>
      %cst_79 = arith.constant 1.000000e+00 : f32
      %126 = vector.broadcast %cst_79 : f32 to vector<1x128xf32>
      %127 = arith.subf %126, %122 : vector<1x128xf32>
      %cst_80 = arith.constant 0.000000e+00 : f32
      %128 = vector.broadcast %cst_80 : f32 to vector<1x128xf32>
      %129 = arith.maximumf %127, %128 : vector<1x128xf32>
      %cst_81 = arith.constant 0.000000e+00 : f32
      %130 = vector.broadcast %cst_81 : f32 to vector<1x128xf32>
      %131 = arith.select %119, %129, %130 : vector<1x128xi1>, vector<1x128xf32>
      %cst_82 = arith.constant 1.000000e+00 : f32
      %132 = vector.broadcast %cst_82 : f32 to vector<1x128xf32>
      %133 = arith.subf %132, %125 : vector<1x128xf32>
      %cst_83 = arith.constant 0.000000e+00 : f32
      %134 = vector.broadcast %cst_83 : f32 to vector<1x128xf32>
      %135 = arith.maximumf %133, %134 : vector<1x128xf32>
      %cst_84 = arith.constant 0.000000e+00 : f32
      %136 = vector.broadcast %cst_84 : f32 to vector<1x128xf32>
      %137 = arith.select %119, %135, %136 : vector<1x128xi1>, vector<1x128xf32>
      %138 = arith.addf %131, %137 : vector<1x128xf32>
      %139 = vector.shape_cast %138 : vector<1x128xf32> to vector<1x1x128xf32>
      %cst_85 = arith.constant dense<0.000000e+00> : vector<1xf32>
      %140 = vector.multi_reduction <add>, %139, %cst_85 [1, 2] : vector<1x1x128xf32> to vector<1xf32>
      %141 = vector.shape_cast %140 : vector<1xf32> to vector<1x1x1xf32>
      %142 = vector.extract %141[0, 0, 0] : f32 from vector<1x1x1xf32>
      %cst_86 = arith.constant 3.200000e+01 : f32
      %143 = arith.divf %142, %cst_86 : f32
      %c0_87 = arith.constant 0 : index
      %c0_88 = arith.constant 0 : index
      %144 = vector.load %arg4[%c0_87, %c0_88] : memref<128x128xf32, #tpu.memory_space<vmem>>, vector<128x128xf32>
      %cst_89 = arith.constant dense<0.000000e+00> : vector<1x128xf32>
      %145 = tpu.matmul %99, %144, %cst_89 {dimension_numbers = #tpu.dot_dimension_numbers<[1], [0], [0], [1], [0, 0, 1, 1], [], []>} : vector<1x128xf32>, vector<128x128xf32>, vector<1x128xf32> -> vector<1x128xf32>
      %146 = arith.mulf %145, %99 : vector<1x128xf32>
      %147 = vector.shape_cast %146 : vector<1x128xf32> to vector<1x1x128xf32>
      %cst_90 = arith.constant dense<0.000000e+00> : vector<1xf32>
      %148 = vector.multi_reduction <add>, %147, %cst_90 [1, 2] : vector<1x1x128xf32> to vector<1xf32>
      %149 = vector.shape_cast %148 : vector<1xf32> to vector<1x1x1xf32>
      %150 = vector.extract %149[0, 0, 0] : f32 from vector<1x1x1xf32>
      %151 = arith.mulf %99, %99 : vector<1x128xf32>
      %152 = vector.shape_cast %151 : vector<1x128xf32> to vector<1x1x128xf32>
      %cst_91 = arith.constant dense<0.000000e+00> : vector<1xf32>
      %153 = vector.multi_reduction <add>, %152, %cst_91 [1, 2] : vector<1x1x128xf32> to vector<1xf32>
      %154 = vector.shape_cast %153 : vector<1xf32> to vector<1x1x1xf32>
      %155 = vector.extract %154[0, 0, 0] : f32 from vector<1x1x1xf32>
      %156 = arith.mulf %144, %144 : vector<128x128xf32>
      %157 = vector.shape_cast %156 : vector<128x128xf32> to vector<1x128x128xf32>
      %cst_92 = arith.constant dense<0.000000e+00> : vector<1xf32>
      %158 = vector.multi_reduction <add>, %157, %cst_92 [1, 2] : vector<1x128x128xf32> to vector<1xf32>
      %159 = vector.shape_cast %158 : vector<1xf32> to vector<1x1x1xf32>
      %160 = vector.extract %159[0, 0, 0] : f32 from vector<1x1x1xf32>
      %cst_93 = arith.constant 2.000000e+00 : f32
      %cst_94 = arith.constant 8.000000e+00 : f32
      %161 = arith.mulf %cst_93, %cst_94 : f32
      %162 = arith.mulf %161, %150 : f32
      %163 = arith.subf %160, %162 : f32
      %cst_95 = arith.constant 8.000000e+00 : f32
      %cst_96 = arith.constant 8.000000e+00 : f32
      %164 = arith.mulf %cst_95, %cst_96 : f32
      %165 = arith.mulf %164, %155 : f32
      %166 = arith.mulf %165, %155 : f32
      %167 = arith.addf %163, %166 : f32
      %168 = arith.mulf %96, %96 : f32
      %169 = arith.mulf %167, %168 : f32
      %170 = arith.mulf %109, %109 : vector<1x128xf32>
      %171 = vector.shape_cast %170 : vector<1x128xf32> to vector<1x1x128xf32>
      %cst_97 = arith.constant dense<0.000000e+00> : vector<1xf32>
      %172 = vector.multi_reduction <add>, %171, %cst_97 [1, 2] : vector<1x1x128xf32> to vector<1xf32>
      %173 = vector.shape_cast %172 : vector<1xf32> to vector<1x1x1xf32>
      %174 = vector.extract %173[0, 0, 0] : f32 from vector<1x1x1xf32>
      %175 = arith.subf %169, %174 : f32
      %c0_98 = arith.constant 0 : index
      %c0_99 = arith.constant 0 : index
      %176 = vector.load %arg5[%c0_98, %c0_99] : memref<128x128xf32, #tpu.memory_space<vmem>>, vector<128x128xf32>
      %cst_100 = arith.constant dense<0.000000e+00> : vector<1x128xf32>
      %177 = tpu.matmul %102, %176, %cst_100 {dimension_numbers = #tpu.dot_dimension_numbers<[1], [0], [0], [1], [0, 0, 1, 1], [], []>} : vector<1x128xf32>, vector<128x128xf32>, vector<1x128xf32> -> vector<1x128xf32>
      %178 = arith.mulf %177, %102 : vector<1x128xf32>
      %179 = vector.shape_cast %178 : vector<1x128xf32> to vector<1x1x128xf32>
      %cst_101 = arith.constant dense<0.000000e+00> : vector<1xf32>
      %180 = vector.multi_reduction <add>, %179, %cst_101 [1, 2] : vector<1x1x128xf32> to vector<1xf32>
      %181 = vector.shape_cast %180 : vector<1xf32> to vector<1x1x1xf32>
      %182 = vector.extract %181[0, 0, 0] : f32 from vector<1x1x1xf32>
      %183 = arith.mulf %102, %102 : vector<1x128xf32>
      %184 = vector.shape_cast %183 : vector<1x128xf32> to vector<1x1x128xf32>
      %cst_102 = arith.constant dense<0.000000e+00> : vector<1xf32>
      %185 = vector.multi_reduction <add>, %184, %cst_102 [1, 2] : vector<1x1x128xf32> to vector<1xf32>
      %186 = vector.shape_cast %185 : vector<1xf32> to vector<1x1x1xf32>
      %187 = vector.extract %186[0, 0, 0] : f32 from vector<1x1x1xf32>
      %188 = arith.mulf %176, %176 : vector<128x128xf32>
      %189 = vector.shape_cast %188 : vector<128x128xf32> to vector<1x128x128xf32>
      %cst_103 = arith.constant dense<0.000000e+00> : vector<1xf32>
      %190 = vector.multi_reduction <add>, %189, %cst_103 [1, 2] : vector<1x128x128xf32> to vector<1xf32>
      %191 = vector.shape_cast %190 : vector<1xf32> to vector<1x1x1xf32>
      %192 = vector.extract %191[0, 0, 0] : f32 from vector<1x1x1xf32>
      %cst_104 = arith.constant 2.000000e+00 : f32
      %cst_105 = arith.constant 8.000000e+00 : f32
      %193 = arith.mulf %cst_104, %cst_105 : f32
      %194 = arith.mulf %193, %182 : f32
      %195 = arith.subf %192, %194 : f32
      %cst_106 = arith.constant 8.000000e+00 : f32
      %cst_107 = arith.constant 8.000000e+00 : f32
      %196 = arith.mulf %cst_106, %cst_107 : f32
      %197 = arith.mulf %196, %187 : f32
      %198 = arith.mulf %197, %187 : f32
      %199 = arith.addf %195, %198 : f32
      %200 = arith.mulf %96, %96 : f32
      %201 = arith.mulf %199, %200 : f32
      %202 = arith.addf %175, %201 : f32
      %203 = arith.mulf %116, %116 : vector<1x128xf32>
      %204 = vector.shape_cast %203 : vector<1x128xf32> to vector<1x1x128xf32>
      %cst_108 = arith.constant dense<0.000000e+00> : vector<1xf32>
      %205 = vector.multi_reduction <add>, %204, %cst_108 [1, 2] : vector<1x1x128xf32> to vector<1xf32>
      %206 = vector.shape_cast %205 : vector<1xf32> to vector<1x1x1xf32>
      %207 = vector.extract %206[0, 0, 0] : f32 from vector<1x1x1xf32>
      %208 = arith.subf %202, %207 : f32
      %cst_109 = arith.constant 9.920000e+02 : f32
      %209 = arith.divf %208, %cst_109 : f32
      %c0_110 = arith.constant 0 : index
      %c0_111 = arith.constant 0 : index
      %210 = vector.load %arg10[%c0_110, %c0_111] : memref<1x128xf32, #tpu.memory_space<vmem>>, vector<1x128xf32>
      %211 = vector.shape_cast %210 : vector<1x128xf32> to vector<1x1x128xf32>
      %cst_112 = arith.constant dense<0.000000e+00> : vector<1xf32>
      %212 = vector.multi_reduction <add>, %211, %cst_112 [1, 2] : vector<1x1x128xf32> to vector<1xf32>
      %213 = vector.shape_cast %212 : vector<1xf32> to vector<1x1x1xf32>
      %214 = vector.extract %213[0, 0, 0] : f32 from vector<1x1x1xf32>
      %cst_113 = arith.constant 3.906250e-03 : f32
      %215 = arith.mulf %214, %cst_113 : f32
      %c0_114 = arith.constant 0 : index
      %c0_115 = arith.constant 0 : index
      %216 = vector.load %arg11[%c0_114, %c0_115] : memref<1x128xf32, #tpu.memory_space<vmem>>, vector<1x128xf32>
      %217 = vector.shape_cast %216 : vector<1x128xf32> to vector<1x1x128xf32>
      %cst_116 = arith.constant dense<0.000000e+00> : vector<1xf32>
      %218 = vector.multi_reduction <add>, %217, %cst_116 [1, 2] : vector<1x1x128xf32> to vector<1xf32>
      %219 = vector.shape_cast %218 : vector<1xf32> to vector<1x1x1xf32>
      %220 = vector.extract %219[0, 0, 0] : f32 from vector<1x1x1xf32>
      %c0_117 = arith.constant 0 : index
      %c0_118 = arith.constant 0 : index
      %221 = vector.load %arg12[%c0_117, %c0_118] : memref<1x128xf32, #tpu.memory_space<vmem>>, vector<1x128xf32>
      %222 = vector.shape_cast %221 : vector<1x128xf32> to vector<1x1x128xf32>
      %cst_119 = arith.constant dense<0.000000e+00> : vector<1xf32>
      %223 = vector.multi_reduction <add>, %222, %cst_119 [1, 2] : vector<1x1x128xf32> to vector<1xf32>
      %224 = vector.shape_cast %223 : vector<1xf32> to vector<1x1x1xf32>
      %225 = vector.extract %224[0, 0, 0] : f32 from vector<1x1x1xf32>
      %226 = arith.addf %220, %225 : f32
      %cst_120 = arith.constant 3.000000e-01 : f32
      %227 = arith.mulf %cst_120, %226 : f32
      %cst_121 = arith.constant 2.240000e+02 : f32
      %228 = arith.divf %227, %cst_121 : f32
      %cst_122 = arith.constant 2.500000e+01 : f32
      %229 = arith.mulf %cst_122, %215 : f32
      %cst_123 = arith.constant 2.500000e+01 : f32
      %230 = arith.mulf %cst_123, %143 : f32
      %231 = arith.addf %229, %230 : f32
      %cst_124 = arith.constant 1.000000e+00 : f32
      %232 = arith.mulf %cst_124, %209 : f32
      %233 = arith.addf %231, %232 : f32
      %234 = arith.addf %233, %228 : f32
      %c0_125 = arith.constant 0 : index
      %c0_126 = arith.constant 0 : index
      %235 = memref.load %arg3[%c0_125, %c0_126] : memref<1x1xf32, #tpu.memory_space<smem>>
      memref.store %234, %arg3[%c0_125, %c0_126] : memref<1x1xf32, #tpu.memory_space<smem>>
    } else {
    }
    return
  }
  func.func @transform_0(%arg0: i32) -> (i32, i32) {
    %c0_i32 = arith.constant 0 : i32
    %c0_i32_0 = arith.constant 0 : i32
    return %arg0, %c0_i32 : i32, i32
  }
  func.func @transform_1(%arg0: i32) -> (i32, i32) {
    %c0_i32 = arith.constant 0 : i32
    %c0_i32_0 = arith.constant 0 : i32
    return %arg0, %c0_i32 : i32, i32
  }
  func.func @transform_2(%arg0: i32) -> (i32, i32) {
    %c0_i32 = arith.constant 0 : i32
    %c0_i32_0 = arith.constant 0 : i32
    %c0_i32_1 = arith.constant 0 : i32
    return %c0_i32, %c0_i32_0 : i32, i32
  }
}

</mosaic_0001>

<llo_original>
// kernel: tpu_custom_call.1
$region0: #{tpu_custom_call.1}
  #allocation0 [shape = 'u32[]', space=smem, size = 0x4, offset = 0x4, fixed_abs, tag = 'smem constant byte address 0x4 - core index']
  #allocation1 [shape = 'u32[72,128]{1,0:T(1,128)}', space=vmem, size = 0x9000, scoped, tag = 'internal scratch']
  #allocation2 [shape = 'f32[128,128]{1,0:T(8,128)}', space=vmem, size = 0x10000, scoped, tag = 'scratch operand']
  #allocation3 [shape = 'f32[128,128]{1,0:T(8,128)}', space=vmem, size = 0x10000, scoped, tag = 'scratch operand']
  #allocation4 [shape = 'f32[1,128]{1,0:T(1,128)}', space=vmem, size = 0x200, scoped, tag = 'scratch operand']
  #allocation5 [shape = 'f32[1,128]{1,0:T(1,128)}', space=vmem, size = 0x200, scoped, tag = 'scratch operand']
  #allocation6 [shape = 'f32[1,128]{1,0:T(1,128)}', space=vmem, size = 0x200, scoped, tag = 'scratch operand']
  #allocation7 [shape = 'f32[1,128]{1,0:T(1,128)}', space=vmem, size = 0x200, scoped, tag = 'scratch operand']
  #allocation8 [shape = 'f32[1,128]{1,0:T(1,128)}', space=vmem, size = 0x200, scoped, tag = 'scratch operand']
  #allocation9 [shape = 'f32[1,128]{1,0:T(1,128)}', space=vmem, size = 0x200, scoped, tag = 'scratch operand']
  #allocation10 [shape = 'f32[1,128]{1,0:T(1,128)}', space=vmem, size = 0x200, scoped, tag = 'scratch operand']
  #allocation11 [shape = 'f32[1,128]{1,0:T(1,128)}', space=vmem, size = 0x200, scoped, tag = 'scratch operand']
  #allocation12 [shape = 'f32[1,128]{1,0:T(1,128)}', space=vmem, size = 0x200, scoped, tag = 'scratch operand']
  %s0 = inlined_call_operand.hbm [shape: f32[8,128], index: 0, kind: input, shape index: {}]
  %s1 = inlined_call_operand.hbm [shape: f32[8,128], index: 1, kind: input, shape index: {}]
  %s2 = inlined_call_operand.hbm [shape: f32[1,1], index: 2, kind: output, shape index: {}]
  %s3 = sld [smem:[#allocation0]]
  $region34: #{tpu_custom_call.1} parent=0
    _
  %s5 = ssub.s32 1, %s3
  %s6 = scalar_select 0, %s5, %s3
  $region1: #{tpu_custom_call.1} parent=0
    #allocation13 [shape = 'u8[4096]{0}', space=vmem, size = 0x1000, scoped, tag = 'input window, operand 0, single buffered']
    #allocation14 [shape = 's32[1]{0}', space=sflag, size = 0x4, scoped, tag = 'scoped memory for tpu_custom_call.1']
    #allocation15 [shape = 's32[1]{0}', space=sflag, size = 0x4, scoped, tag = 'scoped memory for tpu_custom_call.1']
    #allocation16 [shape = 'u8[4096]{0}', space=vmem, size = 0x1000, scoped, tag = 'input window, operand 1, single buffered']
    #allocation17 [shape = 's32[1]{0}', space=sflag, size = 0x4, scoped, tag = 'scoped memory for tpu_custom_call.1']
    #allocation18 [shape = 'u8[512]{0}', space=smem, size = 0x200, scoped, tag = 'output window, operand 0, single buffered']
    %7 = vsyncpa [#allocation14], 0
    %8 = vsyncpa [#allocation17], 0
    %9 = vsyncpa [#allocation15], 0
    // Predicated region
    $region2: #{tpu_custom_call.1} parent=1 // pred_check
      _
    $region3: #{tpu_custom_call.1} parent=1 // pred_check_branch
      %11 = sbr.rel (0) target = $region5
    $region4: #{tpu_custom_call.1} parent=1 // pred_region
      %13 = vsyncadd [#allocation14], 0
      %s15 = sshll.u32 %s0, 4
      %s16 = int_to_ptr.hbm [resolvable:$true] %s15
      %s17 = sshll.u32 [#allocation13], 4
      %s18 = int_to_ptr.vmem [resolvable:$true] %s17
      %20 = dma.hbm_to_vmem [thread:$0]  %s16, 128, %s18, [#allocation14]
    $region5: #{tpu_custom_call.1} parent=1 // pred_fallthru
      _
    // Predicated region
    $region6: #{tpu_custom_call.1} parent=1 // pred_check
      _
    $region7: #{tpu_custom_call.1} parent=1 // pred_check_branch
      %22 = sbr.rel (0) target = $region9
    $region8: #{tpu_custom_call.1} parent=1 // pred_region
      %24 = vsyncadd [#allocation17], 0
      %s26 = sshll.u32 %s1, 4
      %s27 = int_to_ptr.hbm [resolvable:$true] %s26
      %s28 = sshll.u32 [#allocation16], 4
      %s29 = int_to_ptr.vmem [resolvable:$true] %s28
      %31 = dma.hbm_to_vmem [thread:$0]  %s27, 128, %s29, [#allocation17]
    $region9: #{tpu_custom_call.1} parent=1 // pred_fallthru
      _
    // Predicated region
    $region10: #{tpu_custom_call.1} parent=1 // pred_check
      _
    $region11: #{tpu_custom_call.1} parent=1 // pred_check_branch
      %33 = sbr.rel (0) target = $region13
    $region12: #{tpu_custom_call.1} parent=1 // pred_region
      %35 = dma.done [#allocation14], 128
    $region13: #{tpu_custom_call.1} parent=1 // pred_fallthru
      _
    // Predicated region
    $region14: #{tpu_custom_call.1} parent=1 // pred_check
      _
    $region15: #{tpu_custom_call.1} parent=1 // pred_check_branch
      %37 = sbr.rel (0) target = $region17
    $region16: #{tpu_custom_call.1} parent=1 // pred_region
      %39 = dma.done [#allocation17], 128
    $region17: #{tpu_custom_call.1} parent=1 // pred_fallthru
      _
    %p40 = scmp.eq.s32.totalorder 0, 0
    // Predicated region
    $region18: #{tpu_custom_call.1} parent=1 // pred_check
      %p41 = pneg %p40
    $region19: #{tpu_custom_call.1} parent=1 // pred_check_branch
      %43 = sbr.rel (%p41) target = $region21
    $region20: #{tpu_custom_call.1} parent=1 // pred_region
      %44 = vst [vmem:[#allocation2] sm:$0xff] 0.0
      %45 = vst [vmem:[#allocation2 + $0x8] sm:$0xff] 0.0
      %46 = vst [vmem:[#allocation2 + $0x10] sm:$0xff] 0.0
      %47 = vst [vmem:[#allocation2 + $0x18] sm:$0xff] 0.0
      %48 = vst [vmem:[#allocation2 + $0x20] sm:$0xff] 0.0
      %49 = vst [vmem:[#allocation2 + $0x28] sm:$0xff] 0.0
      %50 = vst [vmem:[#allocation2 + $0x30] sm:$0xff] 0.0
      %51 = vst [vmem:[#allocation2 + $0x38] sm:$0xff] 0.0
      %52 = vst [vmem:[#allocation2 + $0x40] sm:$0xff] 0.0
      %53 = vst [vmem:[#allocation2 + $0x48] sm:$0xff] 0.0
      %54 = vst [vmem:[#allocation2 + $0x50] sm:$0xff] 0.0
      %55 = vst [vmem:[#allocation2 + $0x58] sm:$0xff] 0.0
      %56 = vst [vmem:[#allocation2 + $0x60] sm:$0xff] 0.0
      %57 = vst [vmem:[#allocation2 + $0x68] sm:$0xff] 0.0
      %58 = vst [vmem:[#allocation2 + $0x70] sm:$0xff] 0.0
      %59 = vst [vmem:[#allocation2 + $0x78] sm:$0xff] 0.0
      %60 = vst [vmem:[#allocation3] sm:$0xff] 0.0
      %61 = vst [vmem:[#allocation3 + $0x8] sm:$0xff] 0.0
      %62 = vst [vmem:[#allocation3 + $0x10] sm:$0xff] 0.0
      %63 = vst [vmem:[#allocation3 + $0x18] sm:$0xff] 0.0
      %64 = vst [vmem:[#allocation3 + $0x20] sm:$0xff] 0.0
      %65 = vst [vmem:[#allocation3 + $0x28] sm:$0xff] 0.0
      %66 = vst [vmem:[#allocation3 + $0x30] sm:$0xff] 0.0
      %67 = vst [vmem:[#allocation3 + $0x38] sm:$0xff] 0.0
      %68 = vst [vmem:[#allocation3 + $0x40] sm:$0xff] 0.0
      %69 = vst [vmem:[#allocation3 + $0x48] sm:$0xff] 0.0
      %70 = vst [vmem:[#allocation3 + $0x50] sm:$0xff] 0.0
      %71 = vst [vmem:[#allocation3 + $0x58] sm:$0xff] 0.0
      %72 = vst [vmem:[#allocation3 + $0x60] sm:$0xff] 0.0
      %73 = vst [vmem:[#allocation3 + $0x68] sm:$0xff] 0.0
      %74 = vst [vmem:[#allocation3 + $0x70] sm:$0xff] 0.0
      %75 = vst [vmem:[#allocation3 + $0x78] sm:$0xff] 0.0
      %76 = vst [vmem:[#allocation4] sm:$0x1] 0.0
      %77 = vst [vmem:[#allocation5] sm:$0x1] 0.0
      %78 = vst [vmem:[#allocation6] sm:$0x1] 0.0
      %79 = vst [vmem:[#allocation7] sm:$0x1] 0.0
      %80 = vst [vmem:[#allocation8] sm:$0x1] 0.0
      %81 = vst [vmem:[#allocation9] sm:$0x1] 0.0
      %82 = vst [vmem:[#allocation10] sm:$0x1] 0.0
      %83 = vst [vmem:[#allocation11] sm:$0x1] 0.0
      %84 = vst [vmem:[#allocation12] sm:$0x1] 0.0
    $region21: #{tpu_custom_call.1} parent=1 // pred_fallthru
      _
    %v85 = vld [vmem:[#allocation13] sm:$0xff]
    %v86 = vld [vmem:[#allocation16] sm:$0xff]
    %v87 = vlaneseq
    %v88 = vshrl.u32 %v87, 7
    %s89 = smul.u32 0, 8
    %v90 = vstv %s89
    %v91 = vadd.s32 %v90, %v88
    %v92 = vld [vmem:[#allocation2] sm:$0xff]
    %v93 = vld [vmem:[#allocation2 + $0x8] sm:$0xff]
    %v94 = vld [vmem:[#allocation2 + $0x10] sm:$0xff]
    %v95 = vld [vmem:[#allocation2 + $0x18] sm:$0xff]
    %v96 = vld [vmem:[#allocation2 + $0x20] sm:$0xff]
    %v97 = vld [vmem:[#allocation2 + $0x28] sm:$0xff]
    %v98 = vld [vmem:[#allocation2 + $0x30] sm:$0xff]
    %v99 = vld [vmem:[#allocation2 + $0x38] sm:$0xff]
    %v100 = vld [vmem:[#allocation2 + $0x40] sm:$0xff]
    %v101 = vld [vmem:[#allocation2 + $0x48] sm:$0xff]
    %v102 = vld [vmem:[#allocation2 + $0x50] sm:$0xff]
    %v103 = vld [vmem:[#allocation2 + $0x58] sm:$0xff]
    %v104 = vld [vmem:[#allocation2 + $0x60] sm:$0xff]
    %v105 = vld [vmem:[#allocation2 + $0x68] sm:$0xff]
    %v106 = vld [vmem:[#allocation2 + $0x70] sm:$0xff]
    %v107 = vld [vmem:[#allocation2 + $0x78] sm:$0xff]
    %108 = vxpose.xlu0.b32.start [1/16] %v85, 128
    %109 = vxpose.xlu0.b32.cont [2/16] 0.0, 128
    %110 = vxpose.xlu0.b32.cont [3/16] 0.0, 128
    %111 = vxpose.xlu0.b32.cont [4/16] 0.0, 128
    %112 = vxpose.xlu0.b32.cont [5/16] 0.0, 128
    %113 = vxpose.xlu0.b32.cont [6/16] 0.0, 128
    %114 = vxpose.xlu0.b32.cont [7/16] 0.0, 128
    %115 = vxpose.xlu0.b32.cont [8/16] 0.0, 128
    %116 = vxpose.xlu0.b32.cont [9/16] 0.0, 128
    %117 = vxpose.xlu0.b32.cont [10/16] 0.0, 128
    %118 = vxpose.xlu0.b32.cont [11/16] 0.0, 128
    %119 = vxpose.xlu0.b32.cont [12/16] 0.0, 128
    %120 = vxpose.xlu0.b32.cont [13/16] 0.0, 128
    %121 = vxpose.xlu0.b32.cont [14/16] 0.0, 128
    %122 = vxpose.xlu0.b32.cont [15/16] 0.0, 128
    %123 = vxpose.xlu0.b32.end [16/16] 0.0, 128
    %v124 = vpop.trf.xlu0
    %v125 = vpop.trf.xlu0
    %v126 = vpop.trf.xlu0
    %v127 = vpop.trf.xlu0
    %v128 = vpop.trf.xlu0
    %v129 = vpop.trf.xlu0
    %v130 = vpop.trf.xlu0
    %v131 = vpop.trf.xlu0
    %v132 = vpop.trf.xlu0
    %v133 = vpop.trf.xlu0
    %v134 = vpop.trf.xlu0
    %v135 = vpop.trf.xlu0
    %v136 = vpop.trf.xlu0
    %v137 = vpop.trf.xlu0
    %v138 = vpop.trf.xlu0
    %v139 = vpop.trf.xlu0
    %vm140 = vcmask 64512
    %v142 = vsel %vm140, %v124, 0
    %v145 = vsel %vm140, %v125, 0
    %v148 = vsel %vm140, %v126, 0
    %v151 = vsel %vm140, %v127, 0
    %v154 = vsel %vm140, %v128, 0
    %v157 = vsel %vm140, %v129, 0
    %v160 = vsel %vm140, %v130, 0
    %v163 = vsel %vm140, %v131, 0
    %v166 = vsel %vm140, %v132, 0
    %v169 = vsel %vm140, %v133, 0
    %v172 = vsel %vm140, %v134, 0
    %v175 = vsel %vm140, %v135, 0
    %v178 = vsel %vm140, %v136, 0
    %v181 = vsel %vm140, %v137, 0
    %v184 = vsel %vm140, %v138, 0
    %v187 = vsel %vm140, %v139, 0
    %189 = vmatpush.msra.mxu0 0.0
    %190 = vmatpush.msra.mxu0 0.0
    %191 = vmatpush.msra.mxu0 0.0
    %192 = vmatpush.msra.mxu0 0.0
    %193 = vmatpush.msra.mxu0 0.0
    %194 = vmatpush.msra.mxu0 0.0
    %195 = vmatpush.msra.mxu0 0.0
    %196 = vmatpush.msra.mxu0 0.0
    %197 = vmatpush.msra.mxu0 0.0
    %198 = vmatpush.msra.mxu0 0.0
    %199 = vmatpush.msra.mxu0 0.0
    %200 = vmatpush.msra.mxu0 0.0
    %201 = vmatpush.msra.mxu0 0.0
    %202 = vmatpush.msra.mxu0 0.0
    %203 = vmatpush.msra.mxu0 0.0
    %204 = vmatpush.msra.mxu0 %v85
    %205 = vmatmul.f32.gmra.mxu0 %v142
    %v206 = vpop.f32.mrf.mxu0
    %v207 = vadd.f32 0.0, %v206
    %208 = vmatmul.f32.gmra.mxu0 %v145
    %v209 = vpop.f32.mrf.mxu0
    %v210 = vadd.f32 0.0, %v209
    %211 = vmatmul.f32.gmra.mxu0 %v148
    %v212 = vpop.f32.mrf.mxu0
    %v213 = vadd.f32 0.0, %v212
    %214 = vmatmul.f32.gmra.mxu0 %v151
    %v215 = vpop.f32.mrf.mxu0
    %v216 = vadd.f32 0.0, %v215
    %217 = vmatmul.f32.gmra.mxu0 %v154
    %v218 = vpop.f32.mrf.mxu0
    %v219 = vadd.f32 0.0, %v218
    %220 = vmatmul.f32.gmra.mxu0 %v157
    %v221 = vpop.f32.mrf.mxu0
    %v222 = vadd.f32 0.0, %v221
    %223 = vmatmul.f32.gmra.mxu0 %v160
    %v224 = vpop.f32.mrf.mxu0
    %v225 = vadd.f32 0.0, %v224
    %226 = vmatmul.f32.gmra.mxu0 %v163
    %v227 = vpop.f32.mrf.mxu0
    %v228 = vadd.f32 0.0, %v227
    %229 = vmatmul.f32.gmra.mxu0 %v166
    %v230 = vpop.f32.mrf.mxu0
    %v231 = vadd.f32 0.0, %v230
    %232 = vmatmul.f32.gmra.mxu0 %v169
    %v233 = vpop.f32.mrf.mxu0
    %v234 = vadd.f32 0.0, %v233
    %235 = vmatmul.f32.gmra.mxu0 %v172
    %v236 = vpop.f32.mrf.mxu0
    %v237 = vadd.f32 0.0, %v236
    %238 = vmatmul.f32.gmra.mxu0 %v175
    %v239 = vpop.f32.mrf.mxu0
    %v240 = vadd.f32 0.0, %v239
    %241 = vmatmul.f32.gmra.mxu0 %v178
    %v242 = vpop.f32.mrf.mxu0
    %v243 = vadd.f32 0.0, %v242
    %244 = vmatmul.f32.gmra.mxu0 %v181
    %v245 = vpop.f32.mrf.mxu0
    %v246 = vadd.f32 0.0, %v245
    %247 = vmatmul.f32.gmra.mxu0 %v184
    %v248 = vpop.f32.mrf.mxu0
    %v249 = vadd.f32 0.0, %v248
    %250 = vmatmul.f32.gmra.mxu0 %v187
    %v251 = vpop.f32.mrf.mxu0
    %v252 = vadd.f32 0.0, %v251
    %253 = vdwg.mxu0
    %v254 = vadd.f32 %v92, %v207
    %v255 = vadd.f32 %v93, %v210
    %v256 = vadd.f32 %v94, %v213
    %v257 = vadd.f32 %v95, %v216
    %v258 = vadd.f32 %v96, %v219
    %v259 = vadd.f32 %v97, %v222
    %v260 = vadd.f32 %v98, %v225
    %v261 = vadd.f32 %v99, %v228
    %v262 = vadd.f32 %v100, %v231
    %v263 = vadd.f32 %v101, %v234
    %v264 = vadd.f32 %v102, %v237
    %v265 = vadd.f32 %v103, %v240
    %v266 = vadd.f32 %v104, %v243
    %v267 = vadd.f32 %v105, %v246
    %v268 = vadd.f32 %v106, %v249
    %v269 = vadd.f32 %v107, %v252
    %270 = vst [vmem:[#allocation2] sm:$0xff] %v254
    %271 = vst [vmem:[#allocation2 + $0x8] sm:$0xff] %v255
    %272 = vst [vmem:[#allocation2 + $0x10] sm:$0xff] %v256
    %273 = vst [vmem:[#allocation2 + $0x18] sm:$0xff] %v257
    %274 = vst [vmem:[#allocation2 + $0x20] sm:$0xff] %v258
    %275 = vst [vmem:[#allocation2 + $0x28] sm:$0xff] %v259
    %276 = vst [vmem:[#allocation2 + $0x30] sm:$0xff] %v260
    %277 = vst [vmem:[#allocation2 + $0x38] sm:$0xff] %v261
    %278 = vst [vmem:[#allocation2 + $0x40] sm:$0xff] %v262
    %279 = vst [vmem:[#allocation2 + $0x48] sm:$0xff] %v263
    %280 = vst [vmem:[#allocation2 + $0x50] sm:$0xff] %v264
    %281 = vst [vmem:[#allocation2 + $0x58] sm:$0xff] %v265
    %282 = vst [vmem:[#allocation2 + $0x60] sm:$0xff] %v266
    %283 = vst [vmem:[#allocation2 + $0x68] sm:$0xff] %v267
    %284 = vst [vmem:[#allocation2 + $0x70] sm:$0xff] %v268
    %285 = vst [vmem:[#allocation2 + $0x78] sm:$0xff] %v269
    %v286 = vld [vmem:[#allocation3] sm:$0xff]
    %v287 = vld [vmem:[#allocation3 + $0x8] sm:$0xff]
    %v288 = vld [vmem:[#allocation3 + $0x10] sm:$0xff]
    %v289 = vld [vmem:[#allocation3 + $0x18] sm:$0xff]
    %v290 = vld [vmem:[#allocation3 + $0x20] sm:$0xff]
    %v291 = vld [vmem:[#allocation3 + $0x28] sm:$0xff]
    %v292 = vld [vmem:[#allocation3 + $0x30] sm:$0xff]
    %v293 = vld [vmem:[#allocation3 + $0x38] sm:$0xff]
    %v294 = vld [vmem:[#allocation3 + $0x40] sm:$0xff]
    %v295 = vld [vmem:[#allocation3 + $0x48] sm:$0xff]
    %v296 = vld [vmem:[#allocation3 + $0x50] sm:$0xff]
    %v297 = vld [vmem:[#allocation3 + $0x58] sm:$0xff]
    %v298 = vld [vmem:[#allocation3 + $0x60] sm:$0xff]
    %v299 = vld [vmem:[#allocation3 + $0x68] sm:$0xff]
    %v300 = vld [vmem:[#allocation3 + $0x70] sm:$0xff]
    %v301 = vld [vmem:[#allocation3 + $0x78] sm:$0xff]
    %302 = vxpose.xlu0.b32.start [1/16] %v86, 128
    %303 = vxpose.xlu0.b32.cont [2/16] 0.0, 128
    %304 = vxpose.xlu0.b32.cont [3/16] 0.0, 128
    %305 = vxpose.xlu0.b32.cont [4/16] 0.0, 128
    %306 = vxpose.xlu0.b32.cont [5/16] 0.0, 128
    %307 = vxpose.xlu0.b32.cont [6/16] 0.0, 128
    %308 = vxpose.xlu0.b32.cont [7/16] 0.0, 128
    %309 = vxpose.xlu0.b32.cont [8/16] 0.0, 128
    %310 = vxpose.xlu0.b32.cont [9/16] 0.0, 128
    %311 = vxpose.xlu0.b32.cont [10/16] 0.0, 128
    %312 = vxpose.xlu0.b32.cont [11/16] 0.0, 128
    %313 = vxpose.xlu0.b32.cont [12/16] 0.0, 128
    %314 = vxpose.xlu0.b32.cont [13/16] 0.0, 128
    %315 = vxpose.xlu0.b32.cont [14/16] 0.0, 128
    %316 = vxpose.xlu0.b32.cont [15/16] 0.0, 128
    %317 = vxpose.xlu0.b32.end [16/16] 0.0, 128
    %v318 = vpop.trf.xlu0
    %v319 = vpop.trf.xlu0
    %v320 = vpop.trf.xlu0
    %v321 = vpop.trf.xlu0
    %v322 = vpop.trf.xlu0
    %v323 = vpop.trf.xlu0
    %v324 = vpop.trf.xlu0
    %v325 = vpop.trf.xlu0
    %v326 = vpop.trf.xlu0
    %v327 = vpop.trf.xlu0
    %v328 = vpop.trf.xlu0
    %v329 = vpop.trf.xlu0
    %v330 = vpop.trf.xlu0
    %v331 = vpop.trf.xlu0
    %v332 = vpop.trf.xlu0
    %v333 = vpop.trf.xlu0
    %v335 = vsel %vm140, %v318, 0
    %v338 = vsel %vm140, %v319, 0
    %v341 = vsel %vm140, %v320, 0
    %v344 = vsel %vm140, %v321, 0
    %v347 = vsel %vm140, %v322, 0
    %v350 = vsel %vm140, %v323, 0
    %v353 = vsel %vm140, %v324, 0
    %v356 = vsel %vm140, %v325, 0
    %v359 = vsel %vm140, %v326, 0
    %v362 = vsel %vm140, %v327, 0
    %v365 = vsel %vm140, %v328, 0
    %v368 = vsel %vm140, %v329, 0
    %v371 = vsel %vm140, %v330, 0
    %v374 = vsel %vm140, %v331, 0
    %v377 = vsel %vm140, %v332, 0
    %v380 = vsel %vm140, %v333, 0
    %382 = vmatpush.msra.mxu0 0.0
    %383 = vmatpush.msra.mxu0 0.0
    %384 = vmatpush.msra.mxu0 0.0
    %385 = vmatpush.msra.mxu0 0.0
    %386 = vmatpush.msra.mxu0 0.0
    %387 = vmatpush.msra.mxu0 0.0
    %388 = vmatpush.msra.mxu0 0.0
    %389 = vmatpush.msra.mxu0 0.0
    %390 = vmatpush.msra.mxu0 0.0
    %391 = vmatpush.msra.mxu0 0.0
    %392 = vmatpush.msra.mxu0 0.0
    %393 = vmatpush.msra.mxu0 0.0
    %394 = vmatpush.msra.mxu0 0.0
    %395 = vmatpush.msra.mxu0 0.0
    %396 = vmatpush.msra.mxu0 0.0
    %397 = vmatpush.msra.mxu0 %v86
    %398 = vmatmul.f32.gmra.mxu0 %v335
    %v399 = vpop.f32.mrf.mxu0
    %v400 = vadd.f32 0.0, %v399
    %401 = vmatmul.f32.gmra.mxu0 %v338
    %v402 = vpop.f32.mrf.mxu0
    %v403 = vadd.f32 0.0, %v402
    %404 = vmatmul.f32.gmra.mxu0 %v341
    %v405 = vpop.f32.mrf.mxu0
    %v406 = vadd.f32 0.0, %v405
    %407 = vmatmul.f32.gmra.mxu0 %v344
    %v408 = vpop.f32.mrf.mxu0
    %v409 = vadd.f32 0.0, %v408
    %410 = vmatmul.f32.gmra.mxu0 %v347
    %v411 = vpop.f32.mrf.mxu0
    %v412 = vadd.f32 0.0, %v411
    %413 = vmatmul.f32.gmra.mxu0 %v350
    %v414 = vpop.f32.mrf.mxu0
    %v415 = vadd.f32 0.0, %v414
    %416 = vmatmul.f32.gmra.mxu0 %v353
    %v417 = vpop.f32.mrf.mxu0
    %v418 = vadd.f32 0.0, %v417
    %419 = vmatmul.f32.gmra.mxu0 %v356
    %v420 = vpop.f32.mrf.mxu0
    %v421 = vadd.f32 0.0, %v420
    %422 = vmatmul.f32.gmra.mxu0 %v359
    %v423 = vpop.f32.mrf.mxu0
    %v424 = vadd.f32 0.0, %v423
    %425 = vmatmul.f32.gmra.mxu0 %v362
    %v426 = vpop.f32.mrf.mxu0
    %v427 = vadd.f32 0.0, %v426
    %428 = vmatmul.f32.gmra.mxu0 %v365
    %v429 = vpop.f32.mrf.mxu0
    %v430 = vadd.f32 0.0, %v429
    %431 = vmatmul.f32.gmra.mxu0 %v368
    %v432 = vpop.f32.mrf.mxu0
    %v433 = vadd.f32 0.0, %v432
    %434 = vmatmul.f32.gmra.mxu0 %v371
    %v435 = vpop.f32.mrf.mxu0
    %v436 = vadd.f32 0.0, %v435
    %437 = vmatmul.f32.gmra.mxu0 %v374
    %v438 = vpop.f32.mrf.mxu0
    %v439 = vadd.f32 0.0, %v438
    %440 = vmatmul.f32.gmra.mxu0 %v377
    %v441 = vpop.f32.mrf.mxu0
    %v442 = vadd.f32 0.0, %v441
    %443 = vmatmul.f32.gmra.mxu0 %v380
    %v444 = vpop.f32.mrf.mxu0
    %v445 = vadd.f32 0.0, %v444
    %446 = vdwg.mxu0
    %v447 = vadd.f32 %v286, %v400
    %v448 = vadd.f32 %v287, %v403
    %v449 = vadd.f32 %v288, %v406
    %v450 = vadd.f32 %v289, %v409
    %v451 = vadd.f32 %v290, %v412
    %v452 = vadd.f32 %v291, %v415
    %v453 = vadd.f32 %v292, %v418
    %v454 = vadd.f32 %v293, %v421
    %v455 = vadd.f32 %v294, %v424
    %v456 = vadd.f32 %v295, %v427
    %v457 = vadd.f32 %v296, %v430
    %v458 = vadd.f32 %v297, %v433
    %v459 = vadd.f32 %v298, %v436
    %v460 = vadd.f32 %v299, %v439
    %v461 = vadd.f32 %v300, %v442
    %v462 = vadd.f32 %v301, %v445
    %463 = vst [vmem:[#allocation3] sm:$0xff] %v447
    %464 = vst [vmem:[#allocation3 + $0x8] sm:$0xff] %v448
    %465 = vst [vmem:[#allocation3 + $0x10] sm:$0xff] %v449
    %466 = vst [vmem:[#allocation3 + $0x18] sm:$0xff] %v450
    %467 = vst [vmem:[#allocation3 + $0x20] sm:$0xff] %v451
    %468 = vst [vmem:[#allocation3 + $0x28] sm:$0xff] %v452
    %469 = vst [vmem:[#allocation3 + $0x30] sm:$0xff] %v453
    %470 = vst [vmem:[#allocation3 + $0x38] sm:$0xff] %v454
    %471 = vst [vmem:[#allocation3 + $0x40] sm:$0xff] %v455
    %472 = vst [vmem:[#allocation3 + $0x48] sm:$0xff] %v456
    %473 = vst [vmem:[#allocation3 + $0x50] sm:$0xff] %v457
    %474 = vst [vmem:[#allocation3 + $0x58] sm:$0xff] %v458
    %475 = vst [vmem:[#allocation3 + $0x60] sm:$0xff] %v459
    %476 = vst [vmem:[#allocation3 + $0x68] sm:$0xff] %v460
    %477 = vst [vmem:[#allocation3 + $0x70] sm:$0xff] %v461
    %478 = vst [vmem:[#allocation3 + $0x78] sm:$0xff] %v462
    %v479 = vld [vmem:[#allocation4] sm:$0x1]
    %v480 = vrot.slane %v85, 4
    %v481 = vadd.f32 %v85, %v480
    %v482 = vrot.slane %v481, 2
    %v483 = vadd.f32 %v481, %v482
    %v484 = vrot.slane %v483, 1
    %v485 = vadd.f32 %v483, %v484
    %v486 = vadd.f32 %v479, %v485
    %487 = vst [vmem:[#allocation4] sm:$0x1] %v486
    %v488 = vld [vmem:[#allocation5] sm:$0x1]
    %v489 = vrot.slane %v86, 4
    %v490 = vadd.f32 %v86, %v489
    %v491 = vrot.slane %v490, 2
    %v492 = vadd.f32 %v490, %v491
    %v493 = vrot.slane %v492, 1
    %v494 = vadd.f32 %v492, %v493
    %v495 = vadd.f32 %v488, %v494
    %496 = vst [vmem:[#allocation5] sm:$0x1] %v495
    %v497 = vld [vmem:[#allocation6] sm:$0x1]
    %v498 = vmul.f32 %v85, %v85
    %v499 = vrot.slane %v498, 4
    %v500 = vadd.f32 %v498, %v499
    %v501 = vrot.slane %v500, 2
    %v502 = vadd.f32 %v500, %v501
    %v503 = vrot.slane %v502, 1
    %v504 = vadd.f32 %v502, %v503
    %v505 = vadd.f32 %v497, %v504
    %506 = vst [vmem:[#allocation6] sm:$0x1] %v505
    %v507 = vld [vmem:[#allocation7] sm:$0x1]
    %v508 = vmul.f32 %v86, %v86
    %v509 = vrot.slane %v508, 4
    %v510 = vadd.f32 %v508, %v509
    %v511 = vrot.slane %v510, 2
    %v512 = vadd.f32 %v510, %v511
    %v513 = vrot.slane %v512, 1
    %v514 = vadd.f32 %v512, %v513
    %v515 = vadd.f32 %v507, %v514
    %516 = vst [vmem:[#allocation7] sm:$0x1] %v515
    %v517 = vsub.f32 %v85, %v86
    %v518 = vld [vmem:[#allocation8] sm:$0x1]
    %v519 = vmul.f32 %v517, %v517
    %v520 = vrot.slane %v519, 4
    %v521 = vadd.f32 %v519, %v520
    %v522 = vrot.slane %v521, 2
    %v523 = vadd.f32 %v521, %v522
    %v524 = vrot.slane %v523, 1
    %v525 = vadd.f32 %v523, %v524
    %v526 = vadd.f32 %v518, %v525
    %527 = vst [vmem:[#allocation8] sm:$0x1] %v526
    %vm528 = vcmp.ge.s32.totalorder %v91, 1
    %vm529 = vcmp.lt.s32.totalorder %v91, 8
    %vm530 = vmand %vm528, %vm529
    %v531 = vsel %vm530, 1, 0
    %v532 = vcvt.s32.f32 %v531
    %vm533 = vcmp.eq.s32.totalorder %v88, 0
    %v534 = vld [vmem:[#allocation11] sm:$0x1]
    %v535 = vrot.slane %v85, 7
    %v536 = vsel %vm533, 1, 0
    %vm537 = vcmp.eq.s32.totalorder %v536, 1
    %v539 = vperm.slane %v534, 0
    %v541 = vsel %vm537, %v539, %v535
    %v542 = vld [vmem:[#allocation12] sm:$0x1]
    %v543 = vrot.slane %v86, 7
    %v545 = vperm.slane %v542, 0
    %v547 = vsel %vm537, %v545, %v543
    %v548 = vsub.f32 %v85, %v541
    %v549 = vsub.f32 %v86, %v547
    %v550 = vld [vmem:[#allocation9] sm:$0x1]
    %v551 = vmul.f32 %v532, %v548
    %v552 = vmul.f32 %v551, %v548
    %v553 = vrot.slane %v552, 4
    %v554 = vadd.f32 %v552, %v553
    %v555 = vrot.slane %v554, 2
    %v556 = vadd.f32 %v554, %v555
    %v557 = vrot.slane %v556, 1
    %v558 = vadd.f32 %v556, %v557
    %v559 = vadd.f32 %v550, %v558
    %560 = vst [vmem:[#allocation9] sm:$0x1] %v559
    %v561 = vld [vmem:[#allocation10] sm:$0x1]
    %v562 = vmul.f32 %v532, %v549
    %v563 = vmul.f32 %v562, %v549
    %v564 = vrot.slane %v563, 4
    %v565 = vadd.f32 %v563, %v564
    %v566 = vrot.slane %v565, 2
    %v567 = vadd.f32 %v565, %v566
    %v568 = vrot.slane %v567, 1
    %v569 = vadd.f32 %v567, %v568
    %v570 = vadd.f32 %v561, %v569
    %571 = vst [vmem:[#allocation10] sm:$0x1] %v570
    %572 = vst [vmem:[#allocation11 - $0x7] sm:$0x80] %v85
    %573 = vst [vmem:[#allocation12 - $0x7] sm:$0x80] %v86
    // Predicated region
    $region22: #{tpu_custom_call.1} parent=1 // pred_check
      %p574 = pneg %p40
    $region23: #{tpu_custom_call.1} parent=1 // pred_check_branch
      %576 = sbr.rel (%p574) target = $region25
    $region24: #{tpu_custom_call.1} parent=1 // pred_region
      %v577 = vld [vmem:[#allocation4] sm:$0x1]
      %v578 = vmul.f32 %v577, 0.125
      %v579 = vld [vmem:[#allocation5] sm:$0x1]
      %v580 = vmul.f32 %v579, 0.125
      %v581 = vld [vmem:[#allocation6] sm:$0x1]
      %v582 = vmul.f32 %v578, 8.0
      %v583 = vmul.f32 %v582, %v578
      %v584 = vsub.f32 %v581, %v583
      %v585 = vmul.f32 %v584, 0.14285715
      %v586 = vld [vmem:[#allocation7] sm:$0x1]
      %v587 = vmul.f32 %v580, 8.0
      %v588 = vmul.f32 %v587, %v580
      %v589 = vsub.f32 %v586, %v588
      %v590 = vmul.f32 %v589, 0.14285715
      %v591 = vlaneseq
      %v592 = vand.u32 %v591, 127
      %vm593 = vcmp.lt.s32.totalorder %v592, 32
      %v594 = vadd.f32 %v585, 0.0001
      %v595 = vrsqrt.pop %v594
      %v596 = vmul.f32 %v595, %v594
      %v597 = vmul.f32 %v596, %v595
      %v598 = vmul.f32 0.5, %v597
      %v599 = vsub.f32 1.5, %v598
      %v600 = vmul.f32 %v595, %v599
      %v601 = vmul.f32 %v594, %v600
      %vm602 = vcmp.eq.f32.partialorder %v594, inf
      %v603 = vsel %vm602, %v594, %v601
      %vm604 = vcmp.eq.f32.partialorder %v594, 0.0
      %v605 = vand.u32 %v594, 2147483648
      %v606 = vsel %vm604, %v605, %v603
      %v607 = vadd.f32 %v590, 0.0001
      %v608 = vrsqrt.pop %v607
      %v609 = vmul.f32 %v608, %v607
      %v610 = vmul.f32 %v609, %v608
      %v611 = vmul.f32 0.5, %v610
      %v612 = vsub.f32 1.5, %v611
      %v613 = vmul.f32 %v608, %v612
      %v614 = vmul.f32 %v607, %v613
      %vm615 = vcmp.eq.f32.partialorder %v607, inf
      %v616 = vsel %vm615, %v607, %v614
      %vm617 = vcmp.eq.f32.partialorder %v607, 0.0
      %v618 = vand.u32 %v607, 2147483648
      %v619 = vsel %vm617, %v618, %v616
      %v620 = vsub.f32 1.0, %v606
      %v621 = vmax.f32 %v620, 0.0
      %v622 = vsel %vm593, %v621, 0.0
      %v623 = vsub.f32 1.0, %v619
      %v624 = vmax.f32 %v623, 0.0
      %v625 = vsel %vm593, %v624, 0.0
      %v626 = vadd.f32 %v622, %v625
      %vm627 = vcmask 1040384
      %v628 = vsel %vm627, %v626, 0.0
      %629 = vadd.xlane.f32.xlu0 %v628
      %v630 = vpop.xlane.xlu0 %629
      %v631 = vrot.slane %v630, 4
      %v632 = vadd.f32 %v630, %v631
      %v633 = vrot.slane %v632, 2
      %v634 = vadd.f32 %v632, %v633
      %v635 = vrot.slane %v634, 1
      %v636 = vadd.f32 %v634, %v635
      %s637 = vtos %v636
      %v638 = vrcp.pop 32.0
      %v639 = vmul.f32 32.0, %v638
      %v640 = vsub.f32 1.0, %v639
      %v641 = vmul.f32 %v638, %v640
      %v642 = vadd.f32 %v638, %v641
      %vm643 = vweird.f32 %v638
      %v644 = vsel %vm643, %v638, %v642
      %s645 = vtos %v644
      %s646 = smul.f32 %s637, %s645
      %v647 = vld [vmem:[#allocation2] sm:$0xff]
      %v648 = vld [vmem:[#allocation2 + $0x8] sm:$0xff]
      %v649 = vld [vmem:[#allocation2 + $0x10] sm:$0xff]
      %v650 = vld [vmem:[#allocation2 + $0x18] sm:$0xff]
      %v651 = vld [vmem:[#allocation2 + $0x20] sm:$0xff]
      %v652 = vld [vmem:[#allocation2 + $0x28] sm:$0xff]
      %v653 = vld [vmem:[#allocation2 + $0x30] sm:$0xff]
      %v654 = vld [vmem:[#allocation2 + $0x38] sm:$0xff]
      %v655 = vld [vmem:[#allocation2 + $0x40] sm:$0xff]
      %v656 = vld [vmem:[#allocation2 + $0x48] sm:$0xff]
      %v657 = vld [vmem:[#allocation2 + $0x50] sm:$0xff]
      %v658 = vld [vmem:[#allocation2 + $0x58] sm:$0xff]
      %v659 = vld [vmem:[#allocation2 + $0x60] sm:$0xff]
      %v660 = vld [vmem:[#allocation2 + $0x68] sm:$0xff]
      %v661 = vld [vmem:[#allocation2 + $0x70] sm:$0xff]
      %v662 = vld [vmem:[#allocation2 + $0x78] sm:$0xff]
      %663 = vmatpush.msra.mxu0 %v662
      %664 = vmatpush.msra.mxu0 %v661
      %665 = vmatpush.msra.mxu0 %v660
      %666 = vmatpush.msra.mxu0 %v659
      %667 = vmatpush.msra.mxu0 %v658
      %668 = vmatpush.msra.mxu0 %v657
      %669 = vmatpush.msra.mxu0 %v656
      %670 = vmatpush.msra.mxu0 %v655
      %671 = vmatpush.msra.mxu0 %v654
      %672 = vmatpush.msra.mxu0 %v653
      %673 = vmatpush.msra.mxu0 %v652
      %674 = vmatpush.msra.mxu0 %v651
      %675 = vmatpush.msra.mxu0 %v650
      %676 = vmatpush.msra.mxu0 %v649
      %677 = vmatpush.msra.mxu0 %v648
      %678 = vmatpush.msra.mxu0 %v647
      %679 = vmatmul.f32.gmra.mxu0 %v578
      %v680 = vpop.f32.mrf.mxu0
      %v681 = vadd.f32 0.0, %v680
      %682 = vdwg.mxu0
      %v683 = vmul.f32 %v681, %v578
      %v684 = vsel %vm627, %v683, 0.0
      %685 = vadd.xlane.f32.xlu0 %v684
      %v686 = vpop.xlane.xlu0 %685
      %v687 = vrot.slane %v686, 4
      %v688 = vadd.f32 %v686, %v687
      %v689 = vrot.slane %v688, 2
      %v690 = vadd.f32 %v688, %v689
      %v691 = vrot.slane %v690, 1
      %v692 = vadd.f32 %v690, %v691
      %s693 = vtos %v692
      %v694 = vmul.f32 %v578, %v578
      %v695 = vsel %vm627, %v694, 0.0
      %696 = vadd.xlane.f32.xlu0 %v695
      %v697 = vpop.xlane.xlu0 %696
      %v698 = vrot.slane %v697, 4
      %v699 = vadd.f32 %v697, %v698
      %v700 = vrot.slane %v699, 2
      %v701 = vadd.f32 %v699, %v700
      %v702 = vrot.slane %v701, 1
      %v703 = vadd.f32 %v701, %v702
      %s704 = vtos %v703
      %v705 = vmul.f32 %v647, %v647
      %v706 = vmul.f32 %v648, %v648
      %v707 = vmul.f32 %v649, %v649
      %v708 = vmul.f32 %v650, %v650
      %v709 = vmul.f32 %v651, %v651
      %v710 = vmul.f32 %v652, %v652
      %v711 = vmul.f32 %v653, %v653
      %v712 = vmul.f32 %v654, %v654
      %v713 = vmul.f32 %v655, %v655
      %v714 = vmul.f32 %v656, %v656
      %v715 = vmul.f32 %v657, %v657
      %v716 = vmul.f32 %v658, %v658
      %v717 = vmul.f32 %v659, %v659
      %v718 = vmul.f32 %v660, %v660
      %v719 = vmul.f32 %v661, %v661
      %v720 = vmul.f32 %v662, %v662
      %v721 = vadd.f32 %v705, %v706
      %v722 = vadd.f32 %v721, %v707
      %v723 = vadd.f32 %v722, %v708
      %v724 = vadd.f32 %v723, %v709
      %v725 = vadd.f32 %v724, %v710
      %v726 = vadd.f32 %v725, %v711
      %v727 = vadd.f32 %v726, %v712
      %v728 = vadd.f32 %v727, %v713
      %v729 = vadd.f32 %v728, %v714
      %v730 = vadd.f32 %v729, %v715
      %v731 = vadd.f32 %v730, %v716
      %v732 = vadd.f32 %v731, %v717
      %v733 = vadd.f32 %v732, %v718
      %v734 = vadd.f32 %v733, %v719
      %v735 = vadd.f32 %v734, %v720
      %736 = vadd.xlane.f32.xlu0 %v735
      %v737 = vpop.xlane.xlu0 %736
      %v738 = vrot.slane %v737, 4
      %v739 = vadd.f32 %v737, %v738
      %v740 = vrot.slane %v739, 2
      %v741 = vadd.f32 %v739, %v740
      %v742 = vrot.slane %v741, 1
      %v743 = vadd.f32 %v741, %v742
      %s744 = vtos %v743
      %s745 = smul.f32 %s693, 16.0
      %s746 = ssub.f32 %s744, %s745
      %s747 = smul.f32 %s704, 64.0
      %s748 = smul.f32 %s747, %s704
      %s749 = sadd.f32 %s746, %s748
      %s750 = smul.f32 %s749, 0.020408165
      %v751 = vmul.f32 %v585, %v585
      %v752 = vsel %vm627, %v751, 0.0
      %753 = vadd.xlane.f32.xlu0 %v752
      %v754 = vpop.xlane.xlu0 %753
      %v755 = vrot.slane %v754, 4
      %v756 = vadd.f32 %v754, %v755
      %v757 = vrot.slane %v756, 2
      %v758 = vadd.f32 %v756, %v757
      %v759 = vrot.slane %v758, 1
      %v760 = vadd.f32 %v758, %v759
      %s761 = vtos %v760
      %s762 = ssub.f32 %s750, %s761
      %v763 = vld [vmem:[#allocation3] sm:$0xff]
      %v764 = vld [vmem:[#allocation3 + $0x8] sm:$0xff]
      %v765 = vld [vmem:[#allocation3 + $0x10] sm:$0xff]
      %v766 = vld [vmem:[#allocation3 + $0x18] sm:$0xff]
      %v767 = vld [vmem:[#allocation3 + $0x20] sm:$0xff]
      %v768 = vld [vmem:[#allocation3 + $0x28] sm:$0xff]
      %v769 = vld [vmem:[#allocation3 + $0x30] sm:$0xff]
      %v770 = vld [vmem:[#allocation3 + $0x38] sm:$0xff]
      %v771 = vld [vmem:[#allocation3 + $0x40] sm:$0xff]
      %v772 = vld [vmem:[#allocation3 + $0x48] sm:$0xff]
      %v773 = vld [vmem:[#allocation3 + $0x50] sm:$0xff]
      %v774 = vld [vmem:[#allocation3 + $0x58] sm:$0xff]
      %v775 = vld [vmem:[#allocation3 + $0x60] sm:$0xff]
      %v776 = vld [vmem:[#allocation3 + $0x68] sm:$0xff]
      %v777 = vld [vmem:[#allocation3 + $0x70] sm:$0xff]
      %v778 = vld [vmem:[#allocation3 + $0x78] sm:$0xff]
      %779 = vmatpush.msra.mxu0 %v778
      %780 = vmatpush.msra.mxu0 %v777
      %781 = vmatpush.msra.mxu0 %v776
      %782 = vmatpush.msra.mxu0 %v775
      %783 = vmatpush.msra.mxu0 %v774
      %784 = vmatpush.msra.mxu0 %v773
      %785 = vmatpush.msra.mxu0 %v772
      %786 = vmatpush.msra.mxu0 %v771
      %787 = vmatpush.msra.mxu0 %v770
      %788 = vmatpush.msra.mxu0 %v769
      %789 = vmatpush.msra.mxu0 %v768
      %790 = vmatpush.msra.mxu0 %v767
      %791 = vmatpush.msra.mxu0 %v766
      %792 = vmatpush.msra.mxu0 %v765
      %793 = vmatpush.msra.mxu0 %v764
      %794 = vmatpush.msra.mxu0 %v763
      %795 = vmatmul.f32.gmra.mxu0 %v580
      %v796 = vpop.f32.mrf.mxu0
      %v797 = vadd.f32 0.0, %v796
      %798 = vdwg.mxu0
      %v799 = vmul.f32 %v797, %v580
      %v800 = vsel %vm627, %v799, 0.0
      %801 = vadd.xlane.f32.xlu0 %v800
      %v802 = vpop.xlane.xlu0 %801
      %v803 = vrot.slane %v802, 4
      %v804 = vadd.f32 %v802, %v803
      %v805 = vrot.slane %v804, 2
      %v806 = vadd.f32 %v804, %v805
      %v807 = vrot.slane %v806, 1
      %v808 = vadd.f32 %v806, %v807
      %s809 = vtos %v808
      %v810 = vmul.f32 %v580, %v580
      %v811 = vsel %vm627, %v810, 0.0
      %812 = vadd.xlane.f32.xlu0 %v811
      %v813 = vpop.xlane.xlu0 %812
      %v814 = vrot.slane %v813, 4
      %v815 = vadd.f32 %v813, %v814
      %v816 = vrot.slane %v815, 2
      %v817 = vadd.f32 %v815, %v816
      %v818 = vrot.slane %v817, 1
      %v819 = vadd.f32 %v817, %v818
      %s820 = vtos %v819
      %v821 = vmul.f32 %v763, %v763
      %v822 = vmul.f32 %v764, %v764
      %v823 = vmul.f32 %v765, %v765
      %v824 = vmul.f32 %v766, %v766
      %v825 = vmul.f32 %v767, %v767
      %v826 = vmul.f32 %v768, %v768
      %v827 = vmul.f32 %v769, %v769
      %v828 = vmul.f32 %v770, %v770
      %v829 = vmul.f32 %v771, %v771
      %v830 = vmul.f32 %v772, %v772
      %v831 = vmul.f32 %v773, %v773
      %v832 = vmul.f32 %v774, %v774
      %v833 = vmul.f32 %v775, %v775
      %v834 = vmul.f32 %v776, %v776
      %v835 = vmul.f32 %v777, %v777
      %v836 = vmul.f32 %v778, %v778
      %v837 = vadd.f32 %v821, %v822
      %v838 = vadd.f32 %v837, %v823
      %v839 = vadd.f32 %v838, %v824
      %v840 = vadd.f32 %v839, %v825
      %v841 = vadd.f32 %v840, %v826
      %v842 = vadd.f32 %v841, %v827
      %v843 = vadd.f32 %v842, %v828
      %v844 = vadd.f32 %v843, %v829
      %v845 = vadd.f32 %v844, %v830
      %v846 = vadd.f32 %v845, %v831
      %v847 = vadd.f32 %v846, %v832
      %v848 = vadd.f32 %v847, %v833
      %v849 = vadd.f32 %v848, %v834
      %v850 = vadd.f32 %v849, %v835
      %v851 = vadd.f32 %v850, %v836
      %852 = vadd.xlane.f32.xlu0 %v851
      %v853 = vpop.xlane.xlu0 %852
      %v854 = vrot.slane %v853, 4
      %v855 = vadd.f32 %v853, %v854
      %v856 = vrot.slane %v855, 2
      %v857 = vadd.f32 %v855, %v856
      %v858 = vrot.slane %v857, 1
      %v859 = vadd.f32 %v857, %v858
      %s860 = vtos %v859
      %s861 = smul.f32 %s809, 16.0
      %s862 = ssub.f32 %s860, %s861
      %s863 = smul.f32 %s820, 64.0
      %s864 = smul.f32 %s863, %s820
      %s865 = sadd.f32 %s862, %s864
      %s866 = smul.f32 %s865, 0.020408165
      %s867 = sadd.f32 %s762, %s866
      %v868 = vmul.f32 %v590, %v590
      %v869 = vsel %vm627, %v868, 0.0
      %870 = vadd.xlane.f32.xlu0 %v869
      %v871 = vpop.xlane.xlu0 %870
      %v872 = vrot.slane %v871, 4
      %v873 = vadd.f32 %v871, %v872
      %v874 = vrot.slane %v873, 2
      %v875 = vadd.f32 %v873, %v874
      %v876 = vrot.slane %v875, 1
      %v877 = vadd.f32 %v875, %v876
      %s878 = vtos %v877
      %s879 = ssub.f32 %s867, %s878
      %v880 = vrcp.pop 992.0
      %v881 = vmul.f32 992.0, %v880
      %v882 = vsub.f32 1.0, %v881
      %v883 = vmul.f32 %v880, %v882
      %v884 = vadd.f32 %v880, %v883
      %vm885 = vweird.f32 %v880
      %v886 = vsel %vm885, %v880, %v884
      %s887 = vtos %v886
      %s888 = smul.f32 %s879, %s887
      %v889 = vld [vmem:[#allocation8] sm:$0x1]
      %v890 = vsel %vm627, %v889, 0.0
      %891 = vadd.xlane.f32.xlu0 %v890
      %v892 = vpop.xlane.xlu0 %891
      %v893 = vrot.slane %v892, 4
      %v894 = vadd.f32 %v892, %v893
      %v895 = vrot.slane %v894, 2
      %v896 = vadd.f32 %v894, %v895
      %v897 = vrot.slane %v896, 1
      %v898 = vadd.f32 %v896, %v897
      %s899 = vtos %v898
      %s900 = smul.f32 %s899, 0.00390625
      %v901 = vld [vmem:[#allocation9] sm:$0x1]
      %v902 = vsel %vm627, %v901, 0.0
      %903 = vadd.xlane.f32.xlu0 %v902
      %v904 = vpop.xlane.xlu0 %903
      %v905 = vrot.slane %v904, 4
      %v906 = vadd.f32 %v904, %v905
      %v907 = vrot.slane %v906, 2
      %v908 = vadd.f32 %v906, %v907
      %v909 = vrot.slane %v908, 1
      %v910 = vadd.f32 %v908, %v909
      %s911 = vtos %v910
      %v912 = vld [vmem:[#allocation10] sm:$0x1]
      %v913 = vsel %vm627, %v912, 0.0
      %914 = vadd.xlane.f32.xlu0 %v913
      %v915 = vpop.xlane.xlu0 %914
      %v916 = vrot.slane %v915, 4
      %v917 = vadd.f32 %v915, %v916
      %v918 = vrot.slane %v917, 2
      %v919 = vadd.f32 %v917, %v918
      %v920 = vrot.slane %v919, 1
      %v921 = vadd.f32 %v919, %v920
      %s922 = vtos %v921
      %s923 = sadd.f32 %s911, %s922
      %s924 = smul.f32 %s923, 0.3
      %v925 = vrcp.pop 224.0
      %v926 = vmul.f32 224.0, %v925
      %v927 = vsub.f32 1.0, %v926
      %v928 = vmul.f32 %v925, %v927
      %v929 = vadd.f32 %v925, %v928
      %vm930 = vweird.f32 %v925
      %v931 = vsel %vm930, %v925, %v929
      %s932 = vtos %v931
      %s933 = smul.f32 %s924, %s932
      %s934 = smul.f32 %s900, 25.0
      %s935 = smul.f32 %s646, 25.0
      %s936 = sadd.f32 %s934, %s935
      %s937 = sadd.f32 %s936, %s888
      %s938 = sadd.f32 %s937, %s933
      %s939 = scalar_lea.smem [#allocation18], 0
      %940 = sst [smem:[%s939]] %s938
    $region25: #{tpu_custom_call.1} parent=1 // pred_fallthru
      _
    // Predicated region
    $region26: #{tpu_custom_call.1} parent=1 // pred_check
      _
    $region27: #{tpu_custom_call.1} parent=1 // pred_check_branch
      %942 = sbr.rel (0) target = $region29
    $region28: #{tpu_custom_call.1} parent=1 // pred_region
      %944 = vsyncadd [#allocation15], 0
      %s946 = sshll.u32 %s2, 4
      %s947 = int_to_ptr.hbm [resolvable:$true] %s946
      %949 = dma.smem_to_hbm [#allocation18], 16, %s947, [#allocation15]
    $region29: #{tpu_custom_call.1} parent=1 // pred_fallthru
      _
    // Predicated region
    $region30: #{tpu_custom_call.1} parent=1 // pred_check
      _
    $region31: #{tpu_custom_call.1} parent=1 // pred_check_branch
      %951 = sbr.rel (0) target = $region33
    $region32: #{tpu_custom_call.1} parent=1 // pred_region
      %953 = dma.done [#allocation15], 16
    $region33: #{tpu_custom_call.1} parent=1 // pred_fallthru
      _
    %954 = sfence
    %955 = vsyncpa [#allocation14], 1
    %956 = vsyncpa [#allocation17], 1
    %957 = vsyncpa [#allocation15], 1

</llo_original>
